<compile_context>
chip_gen: v5e
topology: v5e:2x2
jax: 0.10.0
libtpu: 0.0.40
codegen_flags: <defaults>
</compile_context>

<pallas_src>
import functools
import math

import jax
import jax.numpy as jnp
from jax import lax
from jax.experimental import pallas as pl
from jax.experimental.pallas import tpu as pltpu


# ----------------------------- Pallas kernel -------------------------------

def _spatial_attention_kernel(w_ref, x_ref, o_ref, mm_ref, *, ksize, pad):
    """One batch element:  out = x * sigmoid(conv_kxk([mean_c(x), max_c(x)])).

    w_ref  : SMEM (2*ksize*ksize,) f32 conv weight, order (cin, kh, kw); the
             mean-tap weights (cin=0) are pre-scaled by 1/C by the wrapper.
    x_ref  : VMEM (1, C, H, W) unpadded input block (caller dtype).
    o_ref  : VMEM (1, C, H, W) output block (same dtype as x).
    mm_ref : VMEM scratch (2, H+2p, W+2p) f32 zero-padded sum / max planes.
             NOTE: the zero halo is exactly Conv2d's zero padding of the
             [mean, max] feature maps; this relies on zero padding and on the
             reduce being over the channel axis only.
    """
    c = x_ref.shape[1]
    h = x_ref.shape[2]
    w = x_ref.shape[3]

    # 1) Zero the padded scratch (scratch persists across grid steps, so do it
    #    every step; only the halo really needs it but the planes are tiny).
    mm_ref[...] = jnp.zeros_like(mm_ref)

    # 2) Fused channel SUM + MAX: one pass over C, each plane loaded once.
    #    (1/C is folded into the mean-tap weights, so the raw sum is used.)
    x0 = x_ref[0, 0].astype(jnp.float32)
    s = x0
    m = x0
    for ci in range(1, c):
        xc = x_ref[0, ci].astype(jnp.float32)
        s = s + xc
        m = jnp.maximum(m, xc)
    mm_ref[0, pl.ds(pad, h), pl.ds(pad, w)] = s
    mm_ref[1, pl.ds(pad, h), pl.ds(pad, w)] = m

    # 3) kxk, 2->1 channel conv on the VPU as scalar-broadcast MACs.
    #    kj (lane-direction) shift hoisted: 2*k lane-offset window loads,
    #    inner ki taps are sublane-only slices; 4 independent accumulators
    #    expose ILP instead of one serial add chain.
    accs = [None, None, None, None]
    tap = 0
    for ci in range(2):
        for kj in range(ksize):
            win = mm_ref[ci, :, pl.ds(kj, w)]              # (Hp, W): one lane shift
            for ki in range(ksize):
                wv = w_ref[(ci * ksize + ki) * ksize + kj]  # scalar from SMEM
                term = wv * win[ki:ki + h, :]               # sublane-only offset
                slot = tap % 4
                accs[slot] = term if accs[slot] is None else accs[slot] + term
                tap += 1
    acc = (accs[0] + accs[1]) + (accs[2] + accs[3])

    attn = jax.nn.sigmoid(acc)                              # (H, W), EUP path

    # 4) Gate with the unpadded input block (aligned loads / stores).
    o_ref[...] = (x_ref[...].astype(jnp.float32)
                  * attn[None, None, :, :]).astype(o_ref.dtype)


# ------------------------------ JAX wrapper --------------------------------

@functools.partial(jax.jit, static_argnames=("kernel_size",))
def spatial_attention(x, weight, kernel_size=7):
    """x: (N, C, H, W) NCHW (f32 or bf16).  weight: (1, 2, k, k) OIHW f32.

    Returns (N, C, H, W) in x.dtype.
    """
    n, c, h, w = x.shape
    pad = 3 if kernel_size == 7 else 1
    hp, wp = h + 2 * pad, w + 2 * pad

    # Fold 1/C into the mean-tap weights so the kernel uses the raw channel sum.
    w_f32 = weight.astype(jnp.float32)
    w_scaled = w_f32.at[:, 0, :, :].multiply(1.0 / c)
    w_flat = w_scaled.reshape(-1)                      # (2*k*k,), order (cin, kh, kw)

    kernel = functools.partial(_spatial_attention_kernel,
                               ksize=kernel_size, pad=pad)

    return pl.pallas_call(
        kernel,
        out_shape=jax.ShapeDtypeStruct((n, c, h, w), x.dtype),
        grid=(n,),
        in_specs=[
            pl.BlockSpec(memory_space=pltpu.MemorySpace.SMEM),       # conv weights
            pl.BlockSpec((1, c, h, w), lambda i: (i, 0, 0, 0)),      # unpadded x
        ],
        out_specs=pl.BlockSpec((1, c, h, w), lambda i: (i, 0, 0, 0)),
        scratch_shapes=[pltpu.VMEM((2, hp, wp), jnp.float32)],
        compiler_params=pltpu.CompilerParams(
            dimension_semantics=("parallel",)),                      # megacore over N
    )(w_flat, x)


# ------------------------------ reference ----------------------------------

def _reference(x, weight, kernel_size=7):
    pad = 3 if kernel_size == 7 else 1
    mean = jnp.mean(x, axis=1, keepdims=True)
    mx = jnp.max(x, axis=1, keepdims=True)
    feat = jnp.concatenate([mean, mx], axis=1)                       # (N, 2, H, W)
    conv = lax.conv_general_dilated(
        feat, weight, (1, 1), [(pad, pad), (pad, pad)],
        dimension_numbers=("NCHW", "OIHW", "NCHW"))
    return x * jax.nn.sigmoid(conv)


# -------------------------------- main --------------------------------------

if __name__ == "__main__":
    key = jax.random.PRNGKey(0)
    k_x, k_w = jax.random.split(key)

    N, C, H, W = 2, 4, 16, 16
    KS = 7                                   # module default kernel_size
    fan_in = 2 * KS * KS
    bound = 1.0 / math.sqrt(fan_in)          # PyTorch kaiming_uniform_(a=sqrt(5))

    x = jax.random.normal(k_x, (N, C, H, W), jnp.float32)
    weight = jax.random.uniform(k_w, (1, 2, KS, KS), jnp.float32, -bound, bound)

    out = spatial_attention(x, weight, kernel_size=KS)
    out = jax.block_until_ready(out)

    ref = _reference(x, weight, kernel_size=KS)
    assert out.shape == (N, C, H, W)
    max_err = jnp.max(jnp.abs(out - ref))
    assert jnp.allclose(out, ref, atol=1e-4, rtol=1e-4), f"max err {max_err}"

    print("KERNEL_OK")
</pallas_src>

<mosaic_0001>
module attributes {stable_mosaic.version = 11 : i64} {
  func.func @_spatial_attention_kernel(%arg0: i32, %arg1: memref<98xf32, #tpu.memory_space<smem>>, %arg2: memref<1x4x16x16xf32, #tpu.memory_space<vmem>>, %arg3: memref<1x4x16x16xf32, #tpu.memory_space<vmem>>, %arg4: memref<2x22x22xf32, #tpu.memory_space<vmem>>) attributes {dimension_semantics = [#tpu.dimension_semantics<parallel>], iteration_bounds = array<i64: 2>, scalar_prefetch = 0 : i64, scratch_operands = 1 : i64, tpu.core_type = #tpu.core_type<tc>, window_params = [{transform_indices = @transform_0, window_bounds = array<i64: 98>}, {transform_indices = @transform_1, window_bounds = array<i64: 1, 4, 16, 16>}, {transform_indices = @transform_2, window_bounds = array<i64: 1, 4, 16, 16>}]} {
    %cst = arith.constant 0.000000e+00 : f32
    %0 = vector.broadcast %cst : f32 to vector<2x22x22xf32>
    %c0 = arith.constant 0 : index
    %c0_0 = arith.constant 0 : index
    %c0_1 = arith.constant 0 : index
    %1 = vector.load %arg4[%c0, %c0_0, %c0_1] : memref<2x22x22xf32, #tpu.memory_space<vmem>>, vector<2x22x22xf32>
    tpu.vector_store %arg4[%c0, %c0_0, %c0_1], %0 {strides = array<i32>} : memref<2x22x22xf32, #tpu.memory_space<vmem>>, vector<2x22x22xf32>,
    %c0_2 = arith.constant 0 : index
    %c0_3 = arith.constant 0 : index
    %c0_4 = arith.constant 0 : index
    %c0_5 = arith.constant 0 : index
    %2 = vector.load %arg2[%c0_2, %c0_3, %c0_4, %c0_5] : memref<1x4x16x16xf32, #tpu.memory_space<vmem>>, vector<1x1x16x16xf32>
    %3 = vector.shape_cast %2 : vector<1x1x16x16xf32> to vector<16x16xf32>
    %c0_6 = arith.constant 0 : index
    %c1 = arith.constant 1 : index
    %c0_7 = arith.constant 0 : index
    %c0_8 = arith.constant 0 : index
    %4 = vector.load %arg2[%c0_6, %c1, %c0_7, %c0_8] : memref<1x4x16x16xf32, #tpu.memory_space<vmem>>, vector<1x1x16x16xf32>
    %5 = vector.shape_cast %4 : vector<1x1x16x16xf32> to vector<16x16xf32>
    %6 = arith.addf %3, %5 : vector<16x16xf32>
    %7 = arith.maximumf %3, %5 : vector<16x16xf32>
    %c0_9 = arith.constant 0 : index
    %c2 = arith.constant 2 : index
    %c0_10 = arith.constant 0 : index
    %c0_11 = arith.constant 0 : index
    %8 = vector.load %arg2[%c0_9, %c2, %c0_10, %c0_11] : memref<1x4x16x16xf32, #tpu.memory_space<vmem>>, vector<1x1x16x16xf32>
    %9 = vector.shape_cast %8 : vector<1x1x16x16xf32> to vector<16x16xf32>
    %10 = arith.addf %6, %9 : vector<16x16xf32>
    %11 = arith.maximumf %7, %9 : vector<16x16xf32>
    %c0_12 = arith.constant 0 : index
    %c3 = arith.constant 3 : index
    %c0_13 = arith.constant 0 : index
    %c0_14 = arith.constant 0 : index
    %12 = vector.load %arg2[%c0_12, %c3, %c0_13, %c0_14] : memref<1x4x16x16xf32, #tpu.memory_space<vmem>>, vector<1x1x16x16xf32>
    %13 = vector.shape_cast %12 : vector<1x1x16x16xf32> to vector<16x16xf32>
    %14 = arith.addf %10, %13 : vector<16x16xf32>
    %15 = arith.maximumf %11, %13 : vector<16x16xf32>
    %c0_15 = arith.constant 0 : index
    %c3_16 = arith.constant 3 : index
    %c3_17 = arith.constant 3 : index
    %16 = vector.load %arg4[%c0_15, %c3_16, %c3_17] : memref<2x22x22xf32, #tpu.memory_space<vmem>>, vector<1x16x16xf32>
    %17 = vector.shape_cast %16 : vector<1x16x16xf32> to vector<16x16xf32>
    %18 = vector.shape_cast %14 : vector<16x16xf32> to vector<1x16x16xf32>
    tpu.vector_store %arg4[%c0_15, %c3_16, %c3_17], %18 {strides = array<i32>} : memref<2x22x22xf32, #tpu.memory_space<vmem>>, vector<1x16x16xf32>,
    %c1_18 = arith.constant 1 : index
    %c3_19 = arith.constant 3 : index
    %c3_20 = arith.constant 3 : index
    %19 = vector.load %arg4[%c1_18, %c3_19, %c3_20] : memref<2x22x22xf32, #tpu.memory_space<vmem>>, vector<1x16x16xf32>
    %20 = vector.shape_cast %19 : vector<1x16x16xf32> to vector<16x16xf32>
    %21 = vector.shape_cast %15 : vector<16x16xf32> to vector<1x16x16xf32>
    tpu.vector_store %arg4[%c1_18, %c3_19, %c3_20], %21 {strides = array<i32>} : memref<2x22x22xf32, #tpu.memory_space<vmem>>, vector<1x16x16xf32>,
    %c0_21 = arith.constant 0 : index
    %c0_22 = arith.constant 0 : index
    %c0_23 = arith.constant 0 : index
    %22 = vector.load %arg4[%c0_21, %c0_22, %c0_23] : memref<2x22x22xf32, #tpu.memory_space<vmem>>, vector<1x22x16xf32>
    %23 = vector.shape_cast %22 : vector<1x22x16xf32> to vector<22x16xf32>
    %c0_24 = arith.constant 0 : index
    %24 = memref.load %arg1[%c0_24] : memref<98xf32, #tpu.memory_space<smem>>
    %25 = vector.extract_strided_slice %23 {offsets = [0, 0], sizes = [16, 16], strides = [1, 1]} : vector<22x16xf32> to vector<16x16xf32>
    %26 = vector.broadcast %24 : f32 to vector<16x16xf32>
    %27 = arith.mulf %26, %25 : vector<16x16xf32>
    %c7 = arith.constant 7 : index
    %28 = memref.load %arg1[%c7] : memref<98xf32, #tpu.memory_space<smem>>
    %29 = vector.extract_strided_slice %23 {offsets = [1, 0], sizes = [16, 16], strides = [1, 1]} : vector<22x16xf32> to vector<16x16xf32>
    %30 = vector.broadcast %28 : f32 to vector<16x16xf32>
    %31 = arith.mulf %30, %29 : vector<16x16xf32>
    %c14 = arith.constant 14 : index
    %32 = memref.load %arg1[%c14] : memref<98xf32, #tpu.memory_space<smem>>
    %33 = vector.extract_strided_slice %23 {offsets = [2, 0], sizes = [16, 16], strides = [1, 1]} : vector<22x16xf32> to vector<16x16xf32>
    %34 = vector.broadcast %32 : f32 to vector<16x16xf32>
    %35 = arith.mulf %34, %33 : vector<16x16xf32>
    %c21 = arith.constant 21 : index
    %36 = memref.load %arg1[%c21] : memref<98xf32, #tpu.memory_space<smem>>
    %37 = vector.extract_strided_slice %23 {offsets = [3, 0], sizes = [16, 16], strides = [1, 1]} : vector<22x16xf32> to vector<16x16xf32>
    %38 = vector.broadcast %36 : f32 to vector<16x16xf32>
    %39 = arith.mulf %38, %37 : vector<16x16xf32>
    %c28 = arith.constant 28 : index
    %40 = memref.load %arg1[%c28] : memref<98xf32, #tpu.memory_space<smem>>
    %41 = vector.extract_strided_slice %23 {offsets = [4, 0], sizes = [16, 16], strides = [1, 1]} : vector<22x16xf32> to vector<16x16xf32>
    %42 = vector.broadcast %40 : f32 to vector<16x16xf32>
    %43 = arith.mulf %42, %41 : vector<16x16xf32>
    %44 = arith.addf %27, %43 : vector<16x16xf32>
    %c35 = arith.constant 35 : index
    %45 = memref.load %arg1[%c35] : memref<98xf32, #tpu.memory_space<smem>>
    %46 = vector.extract_strided_slice %23 {offsets = [5, 0], sizes = [16, 16], strides = [1, 1]} : vector<22x16xf32> to vector<16x16xf32>
    %47 = vector.broadcast %45 : f32 to vector<16x16xf32>
    %48 = arith.mulf %47, %46 : vector<16x16xf32>
    %49 = arith.addf %31, %48 : vector<16x16xf32>
    %c42 = arith.constant 42 : index
    %50 = memref.load %arg1[%c42] : memref<98xf32, #tpu.memory_space<smem>>
    %51 = vector.extract_strided_slice %23 {offsets = [6, 0], sizes = [16, 16], strides = [1, 1]} : vector<22x16xf32> to vector<16x16xf32>
    %52 = vector.broadcast %50 : f32 to vector<16x16xf32>
    %53 = arith.mulf %52, %51 : vector<16x16xf32>
    %54 = arith.addf %35, %53 : vector<16x16xf32>
    %c0_25 = arith.constant 0 : index
    %c0_26 = arith.constant 0 : index
    %c1_27 = arith.constant 1 : index
    %55 = vector.load %arg4[%c0_25, %c0_26, %c1_27] : memref<2x22x22xf32, #tpu.memory_space<vmem>>, vector<1x22x16xf32>
    %56 = vector.shape_cast %55 : vector<1x22x16xf32> to vector<22x16xf32>
    %c1_28 = arith.constant 1 : index
    %57 = memref.load %arg1[%c1_28] : memref<98xf32, #tpu.memory_space<smem>>
    %58 = vector.extract_strided_slice %56 {offsets = [0, 0], sizes = [16, 16], strides = [1, 1]} : vector<22x16xf32> to vector<16x16xf32>
    %59 = vector.broadcast %57 : f32 to vector<16x16xf32>
    %60 = arith.mulf %59, %58 : vector<16x16xf32>
    %61 = arith.addf %39, %60 : vector<16x16xf32>
    %c8 = arith.constant 8 : index
    %62 = memref.load %arg1[%c8] : memref<98xf32, #tpu.memory_space<smem>>
    %63 = vector.extract_strided_slice %56 {offsets = [1, 0], sizes = [16, 16], strides = [1, 1]} : vector<22x16xf32> to vector<16x16xf32>
    %64 = vector.broadcast %62 : f32 to vector<16x16xf32>
    %65 = arith.mulf %64, %63 : vector<16x16xf32>
    %66 = arith.addf %44, %65 : vector<16x16xf32>
    %c15 = arith.constant 15 : index
    %67 = memref.load %arg1[%c15] : memref<98xf32, #tpu.memory_space<smem>>
    %68 = vector.extract_strided_slice %56 {offsets = [2, 0], sizes = [16, 16], strides = [1, 1]} : vector<22x16xf32> to vector<16x16xf32>
    %69 = vector.broadcast %67 : f32 to vector<16x16xf32>
    %70 = arith.mulf %69, %68 : vector<16x16xf32>
    %71 = arith.addf %49, %70 : vector<16x16xf32>
    %c22 = arith.constant 22 : index
    %72 = memref.load %arg1[%c22] : memref<98xf32, #tpu.memory_space<smem>>
    %73 = vector.extract_strided_slice %56 {offsets = [3, 0], sizes = [16, 16], strides = [1, 1]} : vector<22x16xf32> to vector<16x16xf32>
    %74 = vector.broadcast %72 : f32 to vector<16x16xf32>
    %75 = arith.mulf %74, %73 : vector<16x16xf32>
    %76 = arith.addf %54, %75 : vector<16x16xf32>
    %c29 = arith.constant 29 : index
    %77 = memref.load %arg1[%c29] : memref<98xf32, #tpu.memory_space<smem>>
    %78 = vector.extract_strided_slice %56 {offsets = [4, 0], sizes = [16, 16], strides = [1, 1]} : vector<22x16xf32> to vector<16x16xf32>
    %79 = vector.broadcast %77 : f32 to vector<16x16xf32>
    %80 = arith.mulf %79, %78 : vector<16x16xf32>
    %81 = arith.addf %61, %80 : vector<16x16xf32>
    %c36 = arith.constant 36 : index
    %82 = memref.load %arg1[%c36] : memref<98xf32, #tpu.memory_space<smem>>
    %83 = vector.extract_strided_slice %56 {offsets = [5, 0], sizes = [16, 16], strides = [1, 1]} : vector<22x16xf32> to vector<16x16xf32>
    %84 = vector.broadcast %82 : f32 to vector<16x16xf32>
    %85 = arith.mulf %84, %83 : vector<16x16xf32>
    %86 = arith.addf %66, %85 : vector<16x16xf32>
    %c43 = arith.constant 43 : index
    %87 = memref.load %arg1[%c43] : memref<98xf32, #tpu.memory_space<smem>>
    %88 = vector.extract_strided_slice %56 {offsets = [6, 0], sizes = [16, 16], strides = [1, 1]} : vector<22x16xf32> to vector<16x16xf32>
    %89 = vector.broadcast %87 : f32 to vector<16x16xf32>
    %90 = arith.mulf %89, %88 : vector<16x16xf32>
    %91 = arith.addf %71, %90 : vector<16x16xf32>
    %c0_29 = arith.constant 0 : index
    %c0_30 = arith.constant 0 : index
    %c2_31 = arith.constant 2 : index
    %92 = vector.load %arg4[%c0_29, %c0_30, %c2_31] : memref<2x22x22xf32, #tpu.memory_space<vmem>>, vector<1x22x16xf32>
    %93 = vector.shape_cast %92 : vector<1x22x16xf32> to vector<22x16xf32>
    %c2_32 = arith.constant 2 : index
    %94 = memref.load %arg1[%c2_32] : memref<98xf32, #tpu.memory_space<smem>>
    %95 = vector.extract_strided_slice %93 {offsets = [0, 0], sizes = [16, 16], strides = [1, 1]} : vector<22x16xf32> to vector<16x16xf32>
    %96 = vector.broadcast %94 : f32 to vector<16x16xf32>
    %97 = arith.mulf %96, %95 : vector<16x16xf32>
    %98 = arith.addf %76, %97 : vector<16x16xf32>
    %c9 = arith.constant 9 : index
    %99 = memref.load %arg1[%c9] : memref<98xf32, #tpu.memory_space<smem>>
    %100 = vector.extract_strided_slice %93 {offsets = [1, 0], sizes = [16, 16], strides = [1, 1]} : vector<22x16xf32> to vector<16x16xf32>
    %101 = vector.broadcast %99 : f32 to vector<16x16xf32>
    %102 = arith.mulf %101, %100 : vector<16x16xf32>
    %103 = arith.addf %81, %102 : vector<16x16xf32>
    %c16 = arith.constant 16 : index
    %104 = memref.load %arg1[%c16] : memref<98xf32, #tpu.memory_space<smem>>
    %105 = vector.extract_strided_slice %93 {offsets = [2, 0], sizes = [16, 16], strides = [1, 1]} : vector<22x16xf32> to vector<16x16xf32>
    %106 = vector.broadcast %104 : f32 to vector<16x16xf32>
    %107 = arith.mulf %106, %105 : vector<16x16xf32>
    %108 = arith.addf %86, %107 : vector<16x16xf32>
    %c23 = arith.constant 23 : index
    %109 = memref.load %arg1[%c23] : memref<98xf32, #tpu.memory_space<smem>>
    %110 = vector.extract_strided_slice %93 {offsets = [3, 0], sizes = [16, 16], strides = [1, 1]} : vector<22x16xf32> to vector<16x16xf32>
    %111 = vector.broadcast %109 : f32 to vector<16x16xf32>
    %112 = arith.mulf %111, %110 : vector<16x16xf32>
    %113 = arith.addf %91, %112 : vector<16x16xf32>
    %c30 = arith.constant 30 : index
    %114 = memref.load %arg1[%c30] : memref<98xf32, #tpu.memory_space<smem>>
    %115 = vector.extract_strided_slice %93 {offsets = [4, 0], sizes = [16, 16], strides = [1, 1]} : vector<22x16xf32> to vector<16x16xf32>
    %116 = vector.broadcast %114 : f32 to vector<16x16xf32>
    %117 = arith.mulf %116, %115 : vector<16x16xf32>
    %118 = arith.addf %98, %117 : vector<16x16xf32>
    %c37 = arith.constant 37 : index
    %119 = memref.load %arg1[%c37] : memref<98xf32, #tpu.memory_space<smem>>
    %120 = vector.extract_strided_slice %93 {offsets = [5, 0], sizes = [16, 16], strides = [1, 1]} : vector<22x16xf32> to vector<16x16xf32>
    %121 = vector.broadcast %119 : f32 to vector<16x16xf32>
    %122 = arith.mulf %121, %120 : vector<16x16xf32>
    %123 = arith.addf %103, %122 : vector<16x16xf32>
    %c44 = arith.constant 44 : index
    %124 = memref.load %arg1[%c44] : memref<98xf32, #tpu.memory_space<smem>>
    %125 = vector.extract_strided_slice %93 {offsets = [6, 0], sizes = [16, 16], strides = [1, 1]} : vector<22x16xf32> to vector<16x16xf32>
    %126 = vector.broadcast %124 : f32 to vector<16x16xf32>
    %127 = arith.mulf %126, %125 : vector<16x16xf32>
    %128 = arith.addf %108, %127 : vector<16x16xf32>
    %c0_33 = arith.constant 0 : index
    %c0_34 = arith.constant 0 : index
    %c3_35 = arith.constant 3 : index
    %129 = vector.load %arg4[%c0_33, %c0_34, %c3_35] : memref<2x22x22xf32, #tpu.memory_space<vmem>>, vector<1x22x16xf32>
    %130 = vector.shape_cast %129 : vector<1x22x16xf32> to vector<22x16xf32>
    %c3_36 = arith.constant 3 : index
    %131 = memref.load %arg1[%c3_36] : memref<98xf32, #tpu.memory_space<smem>>
    %132 = vector.extract_strided_slice %130 {offsets = [0, 0], sizes = [16, 16], strides = [1, 1]} : vector<22x16xf32> to vector<16x16xf32>
    %133 = vector.broadcast %131 : f32 to vector<16x16xf32>
    %134 = arith.mulf %133, %132 : vector<16x16xf32>
    %135 = arith.addf %113, %134 : vector<16x16xf32>
    %c10 = arith.constant 10 : index
    %136 = memref.load %arg1[%c10] : memref<98xf32, #tpu.memory_space<smem>>
    %137 = vector.extract_strided_slice %130 {offsets = [1, 0], sizes = [16, 16], strides = [1, 1]} : vector<22x16xf32> to vector<16x16xf32>
    %138 = vector.broadcast %136 : f32 to vector<16x16xf32>
    %139 = arith.mulf %138, %137 : vector<16x16xf32>
    %140 = arith.addf %118, %139 : vector<16x16xf32>
    %c17 = arith.constant 17 : index
    %141 = memref.load %arg1[%c17] : memref<98xf32, #tpu.memory_space<smem>>
    %142 = vector.extract_strided_slice %130 {offsets = [2, 0], sizes = [16, 16], strides = [1, 1]} : vector<22x16xf32> to vector<16x16xf32>
    %143 = vector.broadcast %141 : f32 to vector<16x16xf32>
    %144 = arith.mulf %143, %142 : vector<16x16xf32>
    %145 = arith.addf %123, %144 : vector<16x16xf32>
    %c24 = arith.constant 24 : index
    %146 = memref.load %arg1[%c24] : memref<98xf32, #tpu.memory_space<smem>>
    %147 = vector.extract_strided_slice %130 {offsets = [3, 0], sizes = [16, 16], strides = [1, 1]} : vector<22x16xf32> to vector<16x16xf32>
    %148 = vector.broadcast %146 : f32 to vector<16x16xf32>
    %149 = arith.mulf %148, %147 : vector<16x16xf32>
    %150 = arith.addf %128, %149 : vector<16x16xf32>
    %c31 = arith.constant 31 : index
    %151 = memref.load %arg1[%c31] : memref<98xf32, #tpu.memory_space<smem>>
    %152 = vector.extract_strided_slice %130 {offsets = [4, 0], sizes = [16, 16], strides = [1, 1]} : vector<22x16xf32> to vector<16x16xf32>
    %153 = vector.broadcast %151 : f32 to vector<16x16xf32>
    %154 = arith.mulf %153, %152 : vector<16x16xf32>
    %155 = arith.addf %135, %154 : vector<16x16xf32>
    %c38 = arith.constant 38 : index
    %156 = memref.load %arg1[%c38] : memref<98xf32, #tpu.memory_space<smem>>
    %157 = vector.extract_strided_slice %130 {offsets = [5, 0], sizes = [16, 16], strides = [1, 1]} : vector<22x16xf32> to vector<16x16xf32>
    %158 = vector.broadcast %156 : f32 to vector<16x16xf32>
    %159 = arith.mulf %158, %157 : vector<16x16xf32>
    %160 = arith.addf %140, %159 : vector<16x16xf32>
    %c45 = arith.constant 45 : index
    %161 = memref.load %arg1[%c45] : memref<98xf32, #tpu.memory_space<smem>>
    %162 = vector.extract_strided_slice %130 {offsets = [6, 0], sizes = [16, 16], strides = [1, 1]} : vector<22x16xf32> to vector<16x16xf32>
    %163 = vector.broadcast %161 : f32 to vector<16x16xf32>
    %164 = arith.mulf %163, %162 : vector<16x16xf32>
    %165 = arith.addf %145, %164 : vector<16x16xf32>
    %c0_37 = arith.constant 0 : index
    %c0_38 = arith.constant 0 : index
    %c4 = arith.constant 4 : index
    %166 = vector.load %arg4[%c0_37, %c0_38, %c4] : memref<2x22x22xf32, #tpu.memory_space<vmem>>, vector<1x22x16xf32>
    %167 = vector.shape_cast %166 : vector<1x22x16xf32> to vector<22x16xf32>
    %c4_39 = arith.constant 4 : index
    %168 = memref.load %arg1[%c4_39] : memref<98xf32, #tpu.memory_space<smem>>
    %169 = vector.extract_strided_slice %167 {offsets = [0, 0], sizes = [16, 16], strides = [1, 1]} : vector<22x16xf32> to vector<16x16xf32>
    %170 = vector.broadcast %168 : f32 to vector<16x16xf32>
    %171 = arith.mulf %170, %169 : vector<16x16xf32>
    %172 = arith.addf %150, %171 : vector<16x16xf32>
    %c11 = arith.constant 11 : index
    %173 = memref.load %arg1[%c11] : memref<98xf32, #tpu.memory_space<smem>>
    %174 = vector.extract_strided_slice %167 {offsets = [1, 0], sizes = [16, 16], strides = [1, 1]} : vector<22x16xf32> to vector<16x16xf32>
    %175 = vector.broadcast %173 : f32 to vector<16x16xf32>
    %176 = arith.mulf %175, %174 : vector<16x16xf32>
    %177 = arith.addf %155, %176 : vector<16x16xf32>
    %c18 = arith.constant 18 : index
    %178 = memref.load %arg1[%c18] : memref<98xf32, #tpu.memory_space<smem>>
    %179 = vector.extract_strided_slice %167 {offsets = [2, 0], sizes = [16, 16], strides = [1, 1]} : vector<22x16xf32> to vector<16x16xf32>
    %180 = vector.broadcast %178 : f32 to vector<16x16xf32>
    %181 = arith.mulf %180, %179 : vector<16x16xf32>
    %182 = arith.addf %160, %181 : vector<16x16xf32>
    %c25 = arith.constant 25 : index
    %183 = memref.load %arg1[%c25] : memref<98xf32, #tpu.memory_space<smem>>
    %184 = vector.extract_strided_slice %167 {offsets = [3, 0], sizes = [16, 16], strides = [1, 1]} : vector<22x16xf32> to vector<16x16xf32>
    %185 = vector.broadcast %183 : f32 to vector<16x16xf32>
    %186 = arith.mulf %185, %184 : vector<16x16xf32>
    %187 = arith.addf %165, %186 : vector<16x16xf32>
    %c32 = arith.constant 32 : index
    %188 = memref.load %arg1[%c32] : memref<98xf32, #tpu.memory_space<smem>>
    %189 = vector.extract_strided_slice %167 {offsets = [4, 0], sizes = [16, 16], strides = [1, 1]} : vector<22x16xf32> to vector<16x16xf32>
    %190 = vector.broadcast %188 : f32 to vector<16x16xf32>
    %191 = arith.mulf %190, %189 : vector<16x16xf32>
    %192 = arith.addf %172, %191 : vector<16x16xf32>
    %c39 = arith.constant 39 : index
    %193 = memref.load %arg1[%c39] : memref<98xf32, #tpu.memory_space<smem>>
    %194 = vector.extract_strided_slice %167 {offsets = [5, 0], sizes = [16, 16], strides = [1, 1]} : vector<22x16xf32> to vector<16x16xf32>
    %195 = vector.broadcast %193 : f32 to vector<16x16xf32>
    %196 = arith.mulf %195, %194 : vector<16x16xf32>
    %197 = arith.addf %177, %196 : vector<16x16xf32>
    %c46 = arith.constant 46 : index
    %198 = memref.load %arg1[%c46] : memref<98xf32, #tpu.memory_space<smem>>
    %199 = vector.extract_strided_slice %167 {offsets = [6, 0], sizes = [16, 16], strides = [1, 1]} : vector<22x16xf32> to vector<16x16xf32>
    %200 = vector.broadcast %198 : f32 to vector<16x16xf32>
    %201 = arith.mulf %200, %199 : vector<16x16xf32>
    %202 = arith.addf %182, %201 : vector<16x16xf32>
    %c0_40 = arith.constant 0 : index
    %c0_41 = arith.constant 0 : index
    %c5 = arith.constant 5 : index
    %203 = vector.load %arg4[%c0_40, %c0_41, %c5] : memref<2x22x22xf32, #tpu.memory_space<vmem>>, vector<1x22x16xf32>
    %204 = vector.shape_cast %203 : vector<1x22x16xf32> to vector<22x16xf32>
    %c5_42 = arith.constant 5 : index
    %205 = memref.load %arg1[%c5_42] : memref<98xf32, #tpu.memory_space<smem>>
    %206 = vector.extract_strided_slice %204 {offsets = [0, 0], sizes = [16, 16], strides = [1, 1]} : vector<22x16xf32> to vector<16x16xf32>
    %207 = vector.broadcast %205 : f32 to vector<16x16xf32>
    %208 = arith.mulf %207, %206 : vector<16x16xf32>
    %209 = arith.addf %187, %208 : vector<16x16xf32>
    %c12 = arith.constant 12 : index
    %210 = memref.load %arg1[%c12] : memref<98xf32, #tpu.memory_space<smem>>
    %211 = vector.extract_strided_slice %204 {offsets = [1, 0], sizes = [16, 16], strides = [1, 1]} : vector<22x16xf32> to vector<16x16xf32>
    %212 = vector.broadcast %210 : f32 to vector<16x16xf32>
    %213 = arith.mulf %212, %211 : vector<16x16xf32>
    %214 = arith.addf %192, %213 : vector<16x16xf32>
    %c19 = arith.constant 19 : index
    %215 = memref.load %arg1[%c19] : memref<98xf32, #tpu.memory_space<smem>>
    %216 = vector.extract_strided_slice %204 {offsets = [2, 0], sizes = [16, 16], strides = [1, 1]} : vector<22x16xf32> to vector<16x16xf32>
    %217 = vector.broadcast %215 : f32 to vector<16x16xf32>
    %218 = arith.mulf %217, %216 : vector<16x16xf32>
    %219 = arith.addf %197, %218 : vector<16x16xf32>
    %c26 = arith.constant 26 : index
    %220 = memref.load %arg1[%c26] : memref<98xf32, #tpu.memory_space<smem>>
    %221 = vector.extract_strided_slice %204 {offsets = [3, 0], sizes = [16, 16], strides = [1, 1]} : vector<22x16xf32> to vector<16x16xf32>
    %222 = vector.broadcast %220 : f32 to vector<16x16xf32>
    %223 = arith.mulf %222, %221 : vector<16x16xf32>
    %224 = arith.addf %202, %223 : vector<16x16xf32>
    %c33 = arith.constant 33 : index
    %225 = memref.load %arg1[%c33] : memref<98xf32, #tpu.memory_space<smem>>
    %226 = vector.extract_strided_slice %204 {offsets = [4, 0], sizes = [16, 16], strides = [1, 1]} : vector<22x16xf32> to vector<16x16xf32>
    %227 = vector.broadcast %225 : f32 to vector<16x16xf32>
    %228 = arith.mulf %227, %226 : vector<16x16xf32>
    %229 = arith.addf %209, %228 : vector<16x16xf32>
    %c40 = arith.constant 40 : index
    %230 = memref.load %arg1[%c40] : memref<98xf32, #tpu.memory_space<smem>>
    %231 = vector.extract_strided_slice %204 {offsets = [5, 0], sizes = [16, 16], strides = [1, 1]} : vector<22x16xf32> to vector<16x16xf32>
    %232 = vector.broadcast %230 : f32 to vector<16x16xf32>
    %233 = arith.mulf %232, %231 : vector<16x16xf32>
    %234 = arith.addf %214, %233 : vector<16x16xf32>
    %c47 = arith.constant 47 : index
    %235 = memref.load %arg1[%c47] : memref<98xf32, #tpu.memory_space<smem>>
    %236 = vector.extract_strided_slice %204 {offsets = [6, 0], sizes = [16, 16], strides = [1, 1]} : vector<22x16xf32> to vector<16x16xf32>
    %237 = vector.broadcast %235 : f32 to vector<16x16xf32>
    %238 = arith.mulf %237, %236 : vector<16x16xf32>
    %239 = arith.addf %219, %238 : vector<16x16xf32>
    %c0_43 = arith.constant 0 : index
    %c0_44 = arith.constant 0 : index
    %c6 = arith.constant 6 : index
    %240 = vector.load %arg4[%c0_43, %c0_44, %c6] : memref<2x22x22xf32, #tpu.memory_space<vmem>>, vector<1x22x16xf32>
    %241 = vector.shape_cast %240 : vector<1x22x16xf32> to vector<22x16xf32>
    %c6_45 = arith.constant 6 : index
    %242 = memref.load %arg1[%c6_45] : memref<98xf32, #tpu.memory_space<smem>>
    %243 = vector.extract_strided_slice %241 {offsets = [0, 0], sizes = [16, 16], strides = [1, 1]} : vector<22x16xf32> to vector<16x16xf32>
    %244 = vector.broadcast %242 : f32 to vector<16x16xf32>
    %245 = arith.mulf %244, %243 : vector<16x16xf32>
    %246 = arith.addf %224, %245 : vector<16x16xf32>
    %c13 = arith.constant 13 : index
    %247 = memref.load %arg1[%c13] : memref<98xf32, #tpu.memory_space<smem>>
    %248 = vector.extract_strided_slice %241 {offsets = [1, 0], sizes = [16, 16], strides = [1, 1]} : vector<22x16xf32> to vector<16x16xf32>
    %249 = vector.broadcast %247 : f32 to vector<16x16xf32>
    %250 = arith.mulf %249, %248 : vector<16x16xf32>
    %251 = arith.addf %229, %250 : vector<16x16xf32>
    %c20 = arith.constant 20 : index
    %252 = memref.load %arg1[%c20] : memref<98xf32, #tpu.memory_space<smem>>
    %253 = vector.extract_strided_slice %241 {offsets = [2, 0], sizes = [16, 16], strides = [1, 1]} : vector<22x16xf32> to vector<16x16xf32>
    %254 = vector.broadcast %252 : f32 to vector<16x16xf32>
    %255 = arith.mulf %254, %253 : vector<16x16xf32>
    %256 = arith.addf %234, %255 : vector<16x16xf32>
    %c27 = arith.constant 27 : index
    %257 = memref.load %arg1[%c27] : memref<98xf32, #tpu.memory_space<smem>>
    %258 = vector.extract_strided_slice %241 {offsets = [3, 0], sizes = [16, 16], strides = [1, 1]} : vector<22x16xf32> to vector<16x16xf32>
    %259 = vector.broadcast %257 : f32 to vector<16x16xf32>
    %260 = arith.mulf %259, %258 : vector<16x16xf32>
    %261 = arith.addf %239, %260 : vector<16x16xf32>
    %c34 = arith.constant 34 : index
    %262 = memref.load %arg1[%c34] : memref<98xf32, #tpu.memory_space<smem>>
    %263 = vector.extract_strided_slice %241 {offsets = [4, 0], sizes = [16, 16], strides = [1, 1]} : vector<22x16xf32> to vector<16x16xf32>
    %264 = vector.broadcast %262 : f32 to vector<16x16xf32>
    %265 = arith.mulf %264, %263 : vector<16x16xf32>
    %266 = arith.addf %246, %265 : vector<16x16xf32>
    %c41 = arith.constant 41 : index
    %267 = memref.load %arg1[%c41] : memref<98xf32, #tpu.memory_space<smem>>
    %268 = vector.extract_strided_slice %241 {offsets = [5, 0], sizes = [16, 16], strides = [1, 1]} : vector<22x16xf32> to vector<16x16xf32>
    %269 = vector.broadcast %267 : f32 to vector<16x16xf32>
    %270 = arith.mulf %269, %268 : vector<16x16xf32>
    %271 = arith.addf %251, %270 : vector<16x16xf32>
    %c48 = arith.constant 48 : index
    %272 = memref.load %arg1[%c48] : memref<98xf32, #tpu.memory_space<smem>>
    %273 = vector.extract_strided_slice %241 {offsets = [6, 0], sizes = [16, 16], strides = [1, 1]} : vector<22x16xf32> to vector<16x16xf32>
    %274 = vector.broadcast %272 : f32 to vector<16x16xf32>
    %275 = arith.mulf %274, %273 : vector<16x16xf32>
    %276 = arith.addf %256, %275 : vector<16x16xf32>
    %c1_46 = arith.constant 1 : index
    %c0_47 = arith.constant 0 : index
    %c0_48 = arith.constant 0 : index
    %277 = vector.load %arg4[%c1_46, %c0_47, %c0_48] : memref<2x22x22xf32, #tpu.memory_space<vmem>>, vector<1x22x16xf32>
    %278 = vector.shape_cast %277 : vector<1x22x16xf32> to vector<22x16xf32>
    %c49 = arith.constant 49 : index
    %279 = memref.load %arg1[%c49] : memref<98xf32, #tpu.memory_space<smem>>
    %280 = vector.extract_strided_slice %278 {offsets = [0, 0], sizes = [16, 16], strides = [1, 1]} : vector<22x16xf32> to vector<16x16xf32>
    %281 = vector.broadcast %279 : f32 to vector<16x16xf32>
    %282 = arith.mulf %281, %280 : vector<16x16xf32>
    %283 = arith.addf %261, %282 : vector<16x16xf32>
    %c56 = arith.constant 56 : index
    %284 = memref.load %arg1[%c56] : memref<98xf32, #tpu.memory_space<smem>>
    %285 = vector.extract_strided_slice %278 {offsets = [1, 0], sizes = [16, 16], strides = [1, 1]} : vector<22x16xf32> to vector<16x16xf32>
    %286 = vector.broadcast %284 : f32 to vector<16x16xf32>
    %287 = arith.mulf %286, %285 : vector<16x16xf32>
    %288 = arith.addf %266, %287 : vector<16x16xf32>
    %c63 = arith.constant 63 : index
    %289 = memref.load %arg1[%c63] : memref<98xf32, #tpu.memory_space<smem>>
    %290 = vector.extract_strided_slice %278 {offsets = [2, 0], sizes = [16, 16], strides = [1, 1]} : vector<22x16xf32> to vector<16x16xf32>
    %291 = vector.broadcast %289 : f32 to vector<16x16xf32>
    %292 = arith.mulf %291, %290 : vector<16x16xf32>
    %293 = arith.addf %271, %292 : vector<16x16xf32>
    %c70 = arith.constant 70 : index
    %294 = memref.load %arg1[%c70] : memref<98xf32, #tpu.memory_space<smem>>
    %295 = vector.extract_strided_slice %278 {offsets = [3, 0], sizes = [16, 16], strides = [1, 1]} : vector<22x16xf32> to vector<16x16xf32>
    %296 = vector.broadcast %294 : f32 to vector<16x16xf32>
    %297 = arith.mulf %296, %295 : vector<16x16xf32>
    %298 = arith.addf %276, %297 : vector<16x16xf32>
    %c77 = arith.constant 77 : index
    %299 = memref.load %arg1[%c77] : memref<98xf32, #tpu.memory_space<smem>>
    %300 = vector.extract_strided_slice %278 {offsets = [4, 0], sizes = [16, 16], strides = [1, 1]} : vector<22x16xf32> to vector<16x16xf32>
    %301 = vector.broadcast %299 : f32 to vector<16x16xf32>
    %302 = arith.mulf %301, %300 : vector<16x16xf32>
    %303 = arith.addf %283, %302 : vector<16x16xf32>
    %c84 = arith.constant 84 : index
    %304 = memref.load %arg1[%c84] : memref<98xf32, #tpu.memory_space<smem>>
    %305 = vector.extract_strided_slice %278 {offsets = [5, 0], sizes = [16, 16], strides = [1, 1]} : vector<22x16xf32> to vector<16x16xf32>
    %306 = vector.broadcast %304 : f32 to vector<16x16xf32>
    %307 = arith.mulf %306, %305 : vector<16x16xf32>
    %308 = arith.addf %288, %307 : vector<16x16xf32>
    %c91 = arith.constant 91 : index
    %309 = memref.load %arg1[%c91] : memref<98xf32, #tpu.memory_space<smem>>
    %310 = vector.extract_strided_slice %278 {offsets = [6, 0], sizes = [16, 16], strides = [1, 1]} : vector<22x16xf32> to vector<16x16xf32>
    %311 = vector.broadcast %309 : f32 to vector<16x16xf32>
    %312 = arith.mulf %311, %310 : vector<16x16xf32>
    %313 = arith.addf %293, %312 : vector<16x16xf32>
    %c1_49 = arith.constant 1 : index
    %c0_50 = arith.constant 0 : index
    %c1_51 = arith.constant 1 : index
    %314 = vector.load %arg4[%c1_49, %c0_50, %c1_51] : memref<2x22x22xf32, #tpu.memory_space<vmem>>, vector<1x22x16xf32>
    %315 = vector.shape_cast %314 : vector<1x22x16xf32> to vector<22x16xf32>
    %c50 = arith.constant 50 : index
    %316 = memref.load %arg1[%c50] : memref<98xf32, #tpu.memory_space<smem>>
    %317 = vector.extract_strided_slice %315 {offsets = [0, 0], sizes = [16, 16], strides = [1, 1]} : vector<22x16xf32> to vector<16x16xf32>
    %318 = vector.broadcast %316 : f32 to vector<16x16xf32>
    %319 = arith.mulf %318, %317 : vector<16x16xf32>
    %320 = arith.addf %298, %319 : vector<16x16xf32>
    %c57 = arith.constant 57 : index
    %321 = memref.load %arg1[%c57] : memref<98xf32, #tpu.memory_space<smem>>
    %322 = vector.extract_strided_slice %315 {offsets = [1, 0], sizes = [16, 16], strides = [1, 1]} : vector<22x16xf32> to vector<16x16xf32>
    %323 = vector.broadcast %321 : f32 to vector<16x16xf32>
    %324 = arith.mulf %323, %322 : vector<16x16xf32>
    %325 = arith.addf %303, %324 : vector<16x16xf32>
    %c64 = arith.constant 64 : index
    %326 = memref.load %arg1[%c64] : memref<98xf32, #tpu.memory_space<smem>>
    %327 = vector.extract_strided_slice %315 {offsets = [2, 0], sizes = [16, 16], strides = [1, 1]} : vector<22x16xf32> to vector<16x16xf32>
    %328 = vector.broadcast %326 : f32 to vector<16x16xf32>
    %329 = arith.mulf %328, %327 : vector<16x16xf32>
    %330 = arith.addf %308, %329 : vector<16x16xf32>
    %c71 = arith.constant 71 : index
    %331 = memref.load %arg1[%c71] : memref<98xf32, #tpu.memory_space<smem>>
    %332 = vector.extract_strided_slice %315 {offsets = [3, 0], sizes = [16, 16], strides = [1, 1]} : vector<22x16xf32> to vector<16x16xf32>
    %333 = vector.broadcast %331 : f32 to vector<16x16xf32>
    %334 = arith.mulf %333, %332 : vector<16x16xf32>
    %335 = arith.addf %313, %334 : vector<16x16xf32>
    %c78 = arith.constant 78 : index
    %336 = memref.load %arg1[%c78] : memref<98xf32, #tpu.memory_space<smem>>
    %337 = vector.extract_strided_slice %315 {offsets = [4, 0], sizes = [16, 16], strides = [1, 1]} : vector<22x16xf32> to vector<16x16xf32>
    %338 = vector.broadcast %336 : f32 to vector<16x16xf32>
    %339 = arith.mulf %338, %337 : vector<16x16xf32>
    %340 = arith.addf %320, %339 : vector<16x16xf32>
    %c85 = arith.constant 85 : index
    %341 = memref.load %arg1[%c85] : memref<98xf32, #tpu.memory_space<smem>>
    %342 = vector.extract_strided_slice %315 {offsets = [5, 0], sizes = [16, 16], strides = [1, 1]} : vector<22x16xf32> to vector<16x16xf32>
    %343 = vector.broadcast %341 : f32 to vector<16x16xf32>
    %344 = arith.mulf %343, %342 : vector<16x16xf32>
    %345 = arith.addf %325, %344 : vector<16x16xf32>
    %c92 = arith.constant 92 : index
    %346 = memref.load %arg1[%c92] : memref<98xf32, #tpu.memory_space<smem>>
    %347 = vector.extract_strided_slice %315 {offsets = [6, 0], sizes = [16, 16], strides = [1, 1]} : vector<22x16xf32> to vector<16x16xf32>
    %348 = vector.broadcast %346 : f32 to vector<16x16xf32>
    %349 = arith.mulf %348, %347 : vector<16x16xf32>
    %350 = arith.addf %330, %349 : vector<16x16xf32>
    %c1_52 = arith.constant 1 : index
    %c0_53 = arith.constant 0 : index
    %c2_54 = arith.constant 2 : index
    %351 = vector.load %arg4[%c1_52, %c0_53, %c2_54] : memref<2x22x22xf32, #tpu.memory_space<vmem>>, vector<1x22x16xf32>
    %352 = vector.shape_cast %351 : vector<1x22x16xf32> to vector<22x16xf32>
    %c51 = arith.constant 51 : index
    %353 = memref.load %arg1[%c51] : memref<98xf32, #tpu.memory_space<smem>>
    %354 = vector.extract_strided_slice %352 {offsets = [0, 0], sizes = [16, 16], strides = [1, 1]} : vector<22x16xf32> to vector<16x16xf32>
    %355 = vector.broadcast %353 : f32 to vector<16x16xf32>
    %356 = arith.mulf %355, %354 : vector<16x16xf32>
    %357 = arith.addf %335, %356 : vector<16x16xf32>
    %c58 = arith.constant 58 : index
    %358 = memref.load %arg1[%c58] : memref<98xf32, #tpu.memory_space<smem>>
    %359 = vector.extract_strided_slice %352 {offsets = [1, 0], sizes = [16, 16], strides = [1, 1]} : vector<22x16xf32> to vector<16x16xf32>
    %360 = vector.broadcast %358 : f32 to vector<16x16xf32>
    %361 = arith.mulf %360, %359 : vector<16x16xf32>
    %362 = arith.addf %340, %361 : vector<16x16xf32>
    %c65 = arith.constant 65 : index
    %363 = memref.load %arg1[%c65] : memref<98xf32, #tpu.memory_space<smem>>
    %364 = vector.extract_strided_slice %352 {offsets = [2, 0], sizes = [16, 16], strides = [1, 1]} : vector<22x16xf32> to vector<16x16xf32>
    %365 = vector.broadcast %363 : f32 to vector<16x16xf32>
    %366 = arith.mulf %365, %364 : vector<16x16xf32>
    %367 = arith.addf %345, %366 : vector<16x16xf32>
    %c72 = arith.constant 72 : index
    %368 = memref.load %arg1[%c72] : memref<98xf32, #tpu.memory_space<smem>>
    %369 = vector.extract_strided_slice %352 {offsets = [3, 0], sizes = [16, 16], strides = [1, 1]} : vector<22x16xf32> to vector<16x16xf32>
    %370 = vector.broadcast %368 : f32 to vector<16x16xf32>
    %371 = arith.mulf %370, %369 : vector<16x16xf32>
    %372 = arith.addf %350, %371 : vector<16x16xf32>
    %c79 = arith.constant 79 : index
    %373 = memref.load %arg1[%c79] : memref<98xf32, #tpu.memory_space<smem>>
    %374 = vector.extract_strided_slice %352 {offsets = [4, 0], sizes = [16, 16], strides = [1, 1]} : vector<22x16xf32> to vector<16x16xf32>
    %375 = vector.broadcast %373 : f32 to vector<16x16xf32>
    %376 = arith.mulf %375, %374 : vector<16x16xf32>
    %377 = arith.addf %357, %376 : vector<16x16xf32>
    %c86 = arith.constant 86 : index
    %378 = memref.load %arg1[%c86] : memref<98xf32, #tpu.memory_space<smem>>
    %379 = vector.extract_strided_slice %352 {offsets = [5, 0], sizes = [16, 16], strides = [1, 1]} : vector<22x16xf32> to vector<16x16xf32>
    %380 = vector.broadcast %378 : f32 to vector<16x16xf32>
    %381 = arith.mulf %380, %379 : vector<16x16xf32>
    %382 = arith.addf %362, %381 : vector<16x16xf32>
    %c93 = arith.constant 93 : index
    %383 = memref.load %arg1[%c93] : memref<98xf32, #tpu.memory_space<smem>>
    %384 = vector.extract_strided_slice %352 {offsets = [6, 0], sizes = [16, 16], strides = [1, 1]} : vector<22x16xf32> to vector<16x16xf32>
    %385 = vector.broadcast %383 : f32 to vector<16x16xf32>
    %386 = arith.mulf %385, %384 : vector<16x16xf32>
    %387 = arith.addf %367, %386 : vector<16x16xf32>
    %c1_55 = arith.constant 1 : index
    %c0_56 = arith.constant 0 : index
    %c3_57 = arith.constant 3 : index
    %388 = vector.load %arg4[%c1_55, %c0_56, %c3_57] : memref<2x22x22xf32, #tpu.memory_space<vmem>>, vector<1x22x16xf32>
    %389 = vector.shape_cast %388 : vector<1x22x16xf32> to vector<22x16xf32>
    %c52 = arith.constant 52 : index
    %390 = memref.load %arg1[%c52] : memref<98xf32, #tpu.memory_space<smem>>
    %391 = vector.extract_strided_slice %389 {offsets = [0, 0], sizes = [16, 16], strides = [1, 1]} : vector<22x16xf32> to vector<16x16xf32>
    %392 = vector.broadcast %390 : f32 to vector<16x16xf32>
    %393 = arith.mulf %392, %391 : vector<16x16xf32>
    %394 = arith.addf %372, %393 : vector<16x16xf32>
    %c59 = arith.constant 59 : index
    %395 = memref.load %arg1[%c59] : memref<98xf32, #tpu.memory_space<smem>>
    %396 = vector.extract_strided_slice %389 {offsets = [1, 0], sizes = [16, 16], strides = [1, 1]} : vector<22x16xf32> to vector<16x16xf32>
    %397 = vector.broadcast %395 : f32 to vector<16x16xf32>
    %398 = arith.mulf %397, %396 : vector<16x16xf32>
    %399 = arith.addf %377, %398 : vector<16x16xf32>
    %c66 = arith.constant 66 : index
    %400 = memref.load %arg1[%c66] : memref<98xf32, #tpu.memory_space<smem>>
    %401 = vector.extract_strided_slice %389 {offsets = [2, 0], sizes = [16, 16], strides = [1, 1]} : vector<22x16xf32> to vector<16x16xf32>
    %402 = vector.broadcast %400 : f32 to vector<16x16xf32>
    %403 = arith.mulf %402, %401 : vector<16x16xf32>
    %404 = arith.addf %382, %403 : vector<16x16xf32>
    %c73 = arith.constant 73 : index
    %405 = memref.load %arg1[%c73] : memref<98xf32, #tpu.memory_space<smem>>
    %406 = vector.extract_strided_slice %389 {offsets = [3, 0], sizes = [16, 16], strides = [1, 1]} : vector<22x16xf32> to vector<16x16xf32>
    %407 = vector.broadcast %405 : f32 to vector<16x16xf32>
    %408 = arith.mulf %407, %406 : vector<16x16xf32>
    %409 = arith.addf %387, %408 : vector<16x16xf32>
    %c80 = arith.constant 80 : index
    %410 = memref.load %arg1[%c80] : memref<98xf32, #tpu.memory_space<smem>>
    %411 = vector.extract_strided_slice %389 {offsets = [4, 0], sizes = [16, 16], strides = [1, 1]} : vector<22x16xf32> to vector<16x16xf32>
    %412 = vector.broadcast %410 : f32 to vector<16x16xf32>
    %413 = arith.mulf %412, %411 : vector<16x16xf32>
    %414 = arith.addf %394, %413 : vector<16x16xf32>
    %c87 = arith.constant 87 : index
    %415 = memref.load %arg1[%c87] : memref<98xf32, #tpu.memory_space<smem>>
    %416 = vector.extract_strided_slice %389 {offsets = [5, 0], sizes = [16, 16], strides = [1, 1]} : vector<22x16xf32> to vector<16x16xf32>
    %417 = vector.broadcast %415 : f32 to vector<16x16xf32>
    %418 = arith.mulf %417, %416 : vector<16x16xf32>
    %419 = arith.addf %399, %418 : vector<16x16xf32>
    %c94 = arith.constant 94 : index
    %420 = memref.load %arg1[%c94] : memref<98xf32, #tpu.memory_space<smem>>
    %421 = vector.extract_strided_slice %389 {offsets = [6, 0], sizes = [16, 16], strides = [1, 1]} : vector<22x16xf32> to vector<16x16xf32>
    %422 = vector.broadcast %420 : f32 to vector<16x16xf32>
    %423 = arith.mulf %422, %421 : vector<16x16xf32>
    %424 = arith.addf %404, %423 : vector<16x16xf32>
    %c1_58 = arith.constant 1 : index
    %c0_59 = arith.constant 0 : index
    %c4_60 = arith.constant 4 : index
    %425 = vector.load %arg4[%c1_58, %c0_59, %c4_60] : memref<2x22x22xf32, #tpu.memory_space<vmem>>, vector<1x22x16xf32>
    %426 = vector.shape_cast %425 : vector<1x22x16xf32> to vector<22x16xf32>
    %c53 = arith.constant 53 : index
    %427 = memref.load %arg1[%c53] : memref<98xf32, #tpu.memory_space<smem>>
    %428 = vector.extract_strided_slice %426 {offsets = [0, 0], sizes = [16, 16], strides = [1, 1]} : vector<22x16xf32> to vector<16x16xf32>
    %429 = vector.broadcast %427 : f32 to vector<16x16xf32>
    %430 = arith.mulf %429, %428 : vector<16x16xf32>
    %431 = arith.addf %409, %430 : vector<16x16xf32>
    %c60 = arith.constant 60 : index
    %432 = memref.load %arg1[%c60] : memref<98xf32, #tpu.memory_space<smem>>
    %433 = vector.extract_strided_slice %426 {offsets = [1, 0], sizes = [16, 16], strides = [1, 1]} : vector<22x16xf32> to vector<16x16xf32>
    %434 = vector.broadcast %432 : f32 to vector<16x16xf32>
    %435 = arith.mulf %434, %433 : vector<16x16xf32>
    %436 = arith.addf %414, %435 : vector<16x16xf32>
    %c67 = arith.constant 67 : index
    %437 = memref.load %arg1[%c67] : memref<98xf32, #tpu.memory_space<smem>>
    %438 = vector.extract_strided_slice %426 {offsets = [2, 0], sizes = [16, 16], strides = [1, 1]} : vector<22x16xf32> to vector<16x16xf32>
    %439 = vector.broadcast %437 : f32 to vector<16x16xf32>
    %440 = arith.mulf %439, %438 : vector<16x16xf32>
    %441 = arith.addf %419, %440 : vector<16x16xf32>
    %c74 = arith.constant 74 : index
    %442 = memref.load %arg1[%c74] : memref<98xf32, #tpu.memory_space<smem>>
    %443 = vector.extract_strided_slice %426 {offsets = [3, 0], sizes = [16, 16], strides = [1, 1]} : vector<22x16xf32> to vector<16x16xf32>
    %444 = vector.broadcast %442 : f32 to vector<16x16xf32>
    %445 = arith.mulf %444, %443 : vector<16x16xf32>
    %446 = arith.addf %424, %445 : vector<16x16xf32>
    %c81 = arith.constant 81 : index
    %447 = memref.load %arg1[%c81] : memref<98xf32, #tpu.memory_space<smem>>
    %448 = vector.extract_strided_slice %426 {offsets = [4, 0], sizes = [16, 16], strides = [1, 1]} : vector<22x16xf32> to vector<16x16xf32>
    %449 = vector.broadcast %447 : f32 to vector<16x16xf32>
    %450 = arith.mulf %449, %448 : vector<16x16xf32>
    %451 = arith.addf %431, %450 : vector<16x16xf32>
    %c88 = arith.constant 88 : index
    %452 = memref.load %arg1[%c88] : memref<98xf32, #tpu.memory_space<smem>>
    %453 = vector.extract_strided_slice %426 {offsets = [5, 0], sizes = [16, 16], strides = [1, 1]} : vector<22x16xf32> to vector<16x16xf32>
    %454 = vector.broadcast %452 : f32 to vector<16x16xf32>
    %455 = arith.mulf %454, %453 : vector<16x16xf32>
    %456 = arith.addf %436, %455 : vector<16x16xf32>
    %c95 = arith.constant 95 : index
    %457 = memref.load %arg1[%c95] : memref<98xf32, #tpu.memory_space<smem>>
    %458 = vector.extract_strided_slice %426 {offsets = [6, 0], sizes = [16, 16], strides = [1, 1]} : vector<22x16xf32> to vector<16x16xf32>
    %459 = vector.broadcast %457 : f32 to vector<16x16xf32>
    %460 = arith.mulf %459, %458 : vector<16x16xf32>
    %461 = arith.addf %441, %460 : vector<16x16xf32>
    %c1_61 = arith.constant 1 : index
    %c0_62 = arith.constant 0 : index
    %c5_63 = arith.constant 5 : index
    %462 = vector.load %arg4[%c1_61, %c0_62, %c5_63] : memref<2x22x22xf32, #tpu.memory_space<vmem>>, vector<1x22x16xf32>
    %463 = vector.shape_cast %462 : vector<1x22x16xf32> to vector<22x16xf32>
    %c54 = arith.constant 54 : index
    %464 = memref.load %arg1[%c54] : memref<98xf32, #tpu.memory_space<smem>>
    %465 = vector.extract_strided_slice %463 {offsets = [0, 0], sizes = [16, 16], strides = [1, 1]} : vector<22x16xf32> to vector<16x16xf32>
    %466 = vector.broadcast %464 : f32 to vector<16x16xf32>
    %467 = arith.mulf %466, %465 : vector<16x16xf32>
    %468 = arith.addf %446, %467 : vector<16x16xf32>
    %c61 = arith.constant 61 : index
    %469 = memref.load %arg1[%c61] : memref<98xf32, #tpu.memory_space<smem>>
    %470 = vector.extract_strided_slice %463 {offsets = [1, 0], sizes = [16, 16], strides = [1, 1]} : vector<22x16xf32> to vector<16x16xf32>
    %471 = vector.broadcast %469 : f32 to vector<16x16xf32>
    %472 = arith.mulf %471, %470 : vector<16x16xf32>
    %473 = arith.addf %451, %472 : vector<16x16xf32>
    %c68 = arith.constant 68 : index
    %474 = memref.load %arg1[%c68] : memref<98xf32, #tpu.memory_space<smem>>
    %475 = vector.extract_strided_slice %463 {offsets = [2, 0], sizes = [16, 16], strides = [1, 1]} : vector<22x16xf32> to vector<16x16xf32>
    %476 = vector.broadcast %474 : f32 to vector<16x16xf32>
    %477 = arith.mulf %476, %475 : vector<16x16xf32>
    %478 = arith.addf %456, %477 : vector<16x16xf32>
    %c75 = arith.constant 75 : index
    %479 = memref.load %arg1[%c75] : memref<98xf32, #tpu.memory_space<smem>>
    %480 = vector.extract_strided_slice %463 {offsets = [3, 0], sizes = [16, 16], strides = [1, 1]} : vector<22x16xf32> to vector<16x16xf32>
    %481 = vector.broadcast %479 : f32 to vector<16x16xf32>
    %482 = arith.mulf %481, %480 : vector<16x16xf32>
    %483 = arith.addf %461, %482 : vector<16x16xf32>
    %c82 = arith.constant 82 : index
    %484 = memref.load %arg1[%c82] : memref<98xf32, #tpu.memory_space<smem>>
    %485 = vector.extract_strided_slice %463 {offsets = [4, 0], sizes = [16, 16], strides = [1, 1]} : vector<22x16xf32> to vector<16x16xf32>
    %486 = vector.broadcast %484 : f32 to vector<16x16xf32>
    %487 = arith.mulf %486, %485 : vector<16x16xf32>
    %488 = arith.addf %468, %487 : vector<16x16xf32>
    %c89 = arith.constant 89 : index
    %489 = memref.load %arg1[%c89] : memref<98xf32, #tpu.memory_space<smem>>
    %490 = vector.extract_strided_slice %463 {offsets = [5, 0], sizes = [16, 16], strides = [1, 1]} : vector<22x16xf32> to vector<16x16xf32>
    %491 = vector.broadcast %489 : f32 to vector<16x16xf32>
    %492 = arith.mulf %491, %490 : vector<16x16xf32>
    %493 = arith.addf %473, %492 : vector<16x16xf32>
    %c96 = arith.constant 96 : index
    %494 = memref.load %arg1[%c96] : memref<98xf32, #tpu.memory_space<smem>>
    %495 = vector.extract_strided_slice %463 {offsets = [6, 0], sizes = [16, 16], strides = [1, 1]} : vector<22x16xf32> to vector<16x16xf32>
    %496 = vector.broadcast %494 : f32 to vector<16x16xf32>
    %497 = arith.mulf %496, %495 : vector<16x16xf32>
    %498 = arith.addf %478, %497 : vector<16x16xf32>
    %c1_64 = arith.constant 1 : index
    %c0_65 = arith.constant 0 : index
    %c6_66 = arith.constant 6 : index
    %499 = vector.load %arg4[%c1_64, %c0_65, %c6_66] : memref<2x22x22xf32, #tpu.memory_space<vmem>>, vector<1x22x16xf32>
    %500 = vector.shape_cast %499 : vector<1x22x16xf32> to vector<22x16xf32>
    %c55 = arith.constant 55 : index
    %501 = memref.load %arg1[%c55] : memref<98xf32, #tpu.memory_space<smem>>
    %502 = vector.extract_strided_slice %500 {offsets = [0, 0], sizes = [16, 16], strides = [1, 1]} : vector<22x16xf32> to vector<16x16xf32>
    %503 = vector.broadcast %501 : f32 to vector<16x16xf32>
    %504 = arith.mulf %503, %502 : vector<16x16xf32>
    %505 = arith.addf %483, %504 : vector<16x16xf32>
    %c62 = arith.constant 62 : index
    %506 = memref.load %arg1[%c62] : memref<98xf32, #tpu.memory_space<smem>>
    %507 = vector.extract_strided_slice %500 {offsets = [1, 0], sizes = [16, 16], strides = [1, 1]} : vector<22x16xf32> to vector<16x16xf32>
    %508 = vector.broadcast %506 : f32 to vector<16x16xf32>
    %509 = arith.mulf %508, %507 : vector<16x16xf32>
    %510 = arith.addf %488, %509 : vector<16x16xf32>
    %c69 = arith.constant 69 : index
    %511 = memref.load %arg1[%c69] : memref<98xf32, #tpu.memory_space<smem>>
    %512 = vector.extract_strided_slice %500 {offsets = [2, 0], sizes = [16, 16], strides = [1, 1]} : vector<22x16xf32> to vector<16x16xf32>
    %513 = vector.broadcast %511 : f32 to vector<16x16xf32>
    %514 = arith.mulf %513, %512 : vector<16x16xf32>
    %515 = arith.addf %493, %514 : vector<16x16xf32>
    %c76 = arith.constant 76 : index
    %516 = memref.load %arg1[%c76] : memref<98xf32, #tpu.memory_space<smem>>
    %517 = vector.extract_strided_slice %500 {offsets = [3, 0], sizes = [16, 16], strides = [1, 1]} : vector<22x16xf32> to vector<16x16xf32>
    %518 = vector.broadcast %516 : f32 to vector<16x16xf32>
    %519 = arith.mulf %518, %517 : vector<16x16xf32>
    %520 = arith.addf %498, %519 : vector<16x16xf32>
    %c83 = arith.constant 83 : index
    %521 = memref.load %arg1[%c83] : memref<98xf32, #tpu.memory_space<smem>>
    %522 = vector.extract_strided_slice %500 {offsets = [4, 0], sizes = [16, 16], strides = [1, 1]} : vector<22x16xf32> to vector<16x16xf32>
    %523 = vector.broadcast %521 : f32 to vector<16x16xf32>
    %524 = arith.mulf %523, %522 : vector<16x16xf32>
    %525 = arith.addf %505, %524 : vector<16x16xf32>
    %c90 = arith.constant 90 : index
    %526 = memref.load %arg1[%c90] : memref<98xf32, #tpu.memory_space<smem>>
    %527 = vector.extract_strided_slice %500 {offsets = [5, 0], sizes = [16, 16], strides = [1, 1]} : vector<22x16xf32> to vector<16x16xf32>
    %528 = vector.broadcast %526 : f32 to vector<16x16xf32>
    %529 = arith.mulf %528, %527 : vector<16x16xf32>
    %530 = arith.addf %510, %529 : vector<16x16xf32>
    %c97 = arith.constant 97 : index
    %531 = memref.load %arg1[%c97] : memref<98xf32, #tpu.memory_space<smem>>
    %532 = vector.extract_strided_slice %500 {offsets = [6, 0], sizes = [16, 16], strides = [1, 1]} : vector<22x16xf32> to vector<16x16xf32>
    %533 = vector.broadcast %531 : f32 to vector<16x16xf32>
    %534 = arith.mulf %533, %532 : vector<16x16xf32>
    %535 = arith.addf %515, %534 : vector<16x16xf32>
    %536 = arith.addf %530, %535 : vector<16x16xf32>
    %537 = arith.addf %520, %525 : vector<16x16xf32>
    %538 = arith.addf %536, %537 : vector<16x16xf32>
    %539 = arith.negf %538 : vector<16x16xf32>
    %540 = math.exp %539 : vector<16x16xf32>
    %cst_67 = arith.constant 1.000000e+00 : f32
    %541 = vector.broadcast %cst_67 : f32 to vector<16x16xf32>
    %542 = arith.addf %541, %540 : vector<16x16xf32>
    %543 = arith.divf %541, %542 : vector<16x16xf32>
    %c0_68 = arith.constant 0 : index
    %c0_69 = arith.constant 0 : index
    %c0_70 = arith.constant 0 : index
    %c0_71 = arith.constant 0 : index
    %544 = vector.load %arg2[%c0_68, %c0_69, %c0_70, %c0_71] : memref<1x4x16x16xf32, #tpu.memory_space<vmem>>, vector<1x4x16x16xf32>
    %545 = vector.shape_cast %543 : vector<16x16xf32> to vector<1x1x16x16xf32>
    %546 = vector.broadcast %545 : vector<1x1x16x16xf32> to vector<1x4x16x16xf32>
    %547 = arith.mulf %544, %546 : vector<1x4x16x16xf32>
    %c0_72 = arith.constant 0 : index
    %c0_73 = arith.constant 0 : index
    %c0_74 = arith.constant 0 : index
    %c0_75 = arith.constant 0 : index
    %548 = vector.load %arg3[%c0_72, %c0_73, %c0_74, %c0_75] : memref<1x4x16x16xf32, #tpu.memory_space<vmem>>, vector<1x4x16x16xf32>
    tpu.vector_store %arg3[%c0_72, %c0_73, %c0_74, %c0_75], %547 {strides = array<i32>} : memref<1x4x16x16xf32, #tpu.memory_space<vmem>>, vector<1x4x16x16xf32>,
    return
  }
  func.func @transform_0(%arg0: i32) -> i32 {
    %c0_i32 = arith.constant 0 : i32
    %c0_i32_0 = arith.constant 0 : i32
    return %c0_i32 : i32
  }
  func.func @transform_1(%arg0: i32) -> (i32, i32, i32, i32) {
    %c0_i32 = arith.constant 0 : i32
    %c0_i32_0 = arith.constant 0 : i32
    %c0_i32_1 = arith.constant 0 : i32
    %c0_i32_2 = arith.constant 0 : i32
    return %arg0, %c0_i32, %c0_i32_0, %c0_i32_1 : i32, i32, i32, i32
  }
  func.func @transform_2(%arg0: i32) -> (i32, i32, i32, i32) {
    %c0_i32 = arith.constant 0 : i32
    %c0_i32_0 = arith.constant 0 : i32
    %c0_i32_1 = arith.constant 0 : i32
    %c0_i32_2 = arith.constant 0 : i32
    return %arg0, %c0_i32, %c0_i32_0, %c0_i32_1 : i32, i32, i32, i32
  }
}

</mosaic_0001>

<llo_original>
// kernel: spatial_attention.1
$region0: #{spatial_attention.1}
  #allocation0 [shape = 'u32[]', space=smem, size = 0x4, offset = 0x4, fixed_abs, tag = 'smem constant byte address 0x4 - core index']
  #allocation1 [shape = 'u32[72,128]{1,0:T(1,128)}', space=vmem, size = 0x9000, scoped, tag = 'internal scratch']
  #allocation2 [shape = 'f32[2,22,22]{2,1,0:T(8,128)}', space=vmem, size = 0x6000, scoped, tag = 'scratch operand']
  %s0 = inlined_call_operand.vmem [shape: f32[98], index: 0, kind: input, shape index: {}]
  %s1 = inlined_call_operand.hbm [shape: f32[2,4,16,16], index: 1, kind: input, shape index: {}]
  %s2 = inlined_call_operand.hbm [shape: f32[2,4,16,16], index: 2, kind: output, shape index: {}]
  %s3 = sld [smem:[#allocation0]]
  $region49: #{spatial_attention.1} parent=0
    _
  %s5 = ssub.s32 1, %s3
  %s6 = scalar_select 0, %s5, %s3
  $region1: #{spatial_attention.1} parent=0
    #allocation3 [shape = 'u8[512]{0}', space=smem, size = 0x200, scoped, tag = 'input window, operand 0, single buffered']
    #allocation4 [shape = 's32[2]{0}', space=sflag, size = 0x8, scoped, tag = 'scoped memory for spatial_attention.1']
    #allocation5 [shape = 's32[2]{0}', space=sflag, size = 0x8, scoped, tag = 'scoped memory for spatial_attention.1']
    #allocation6 [shape = 's32[2]{0}', space=sflag, size = 0x8, scoped, tag = 'scoped memory for spatial_attention.1']
    #allocation7 [shape = 'u8[65536]{0}', space=vmem, size = 0x10000, scoped, tag = 'input window, operand 1']
    #allocation8 [shape = 'u8[65536]{0}', space=vmem, size = 0x10000, scoped, tag = 'output window, operand 0']
    %7 = vsyncpa [#allocation6], 0
    %8 = vsyncpa [#allocation4], 0
    %s9 = scalar_lea.sflag [#allocation4], 1
    %10 = vsyncpa %s9, 0
    %11 = vsyncpa [#allocation5], 0
    %s12 = scalar_lea.sflag [#allocation5], 1
    %13 = vsyncpa %s12, 0
    loop: start=0, step=1, limit=4
    $region2: #{spatial_attention.1} parent=1 // loop_pre_header
      _
    $region3: #{spatial_attention.1} parent=1 // loop_header
      %s15 = sphi 0, %s19
      %p16 = scmp.ge.s32.totalorder %s15, 4
      %s23 = sphi 0, %s23
      %s25 = sphi 0, %s23
      %s26 = sphi 0, %s25
      %s40 = sphi 0, %s26
      %s46 = sphi 0, %s48
      %s49 = sphi 0, %s46
      %s50 = sphi 0, %s49
      %s66 = sphi 0, %s50
      %s72 = sphi 0, %s74
      %s75 = sphi 0, %s72
      %s76 = sphi 0, %s75
      %s92 = sphi 0, %s76
    $region4: #{spatial_attention.1} parent=1 // loop_header_branch
      %18 = sbr.rel (%p16) target = $region8
    $region5: #{spatial_attention.1} parent=1 // loop_body
      %s20 = ssub.s32 %s15, 1
      %s21 = ssub.s32 %s15, 2
      %s22 = sadd.s32 %s15, 1
      %s24 = sadd.s32 %s23, 1
      %p27 = scmp.eq.s32.totalorder %s15, 1
      %p28 = scmp.ne.s32.totalorder %s23, %s25
      %p29 = scmp.eq.s32.totalorder %s15, 0
      %p30 = por %p28, %p29
      %p31 = scmp.ne.s32.totalorder %s23, %s25
      %p32 = scmp.eq.s32.totalorder %s20, 1
      %p33 = por %p31, %p32
      %p34 = scmp.ne.s32.totalorder %s25, %s26
      %p35 = scmp.eq.s32.totalorder %s20, 0
      %p36 = por %p34, %p35
      %p37 = scmp.ne.s32.totalorder %s25, %s26
      %p38 = scmp.eq.s32.totalorder %s21, 1
      %p39 = por %p37, %p38
      %p41 = scmp.ne.s32.totalorder %s26, %s40
      %p42 = scmp.eq.s32.totalorder %s21, 0
      %p43 = por %p41, %p42
      %s44 = ssub.s32 %s15, %s22
      %p45 = scmp.eq.s32.totalorder %s44, 0
      %s47 = sadd.s32 %s46, 1
      %s48 = scalar_select %p45, %s46, %s47
      %p51 = pneg %p45
      %p52 = scmp.eq.s32.totalorder %s15, 1
      %p53 = por %p51, %p52
      %p54 = scmp.ne.s32.totalorder %s46, %s49
      %p55 = scmp.eq.s32.totalorder %s15, 0
      %p56 = por %p54, %p55
      %p57 = scmp.ne.s32.totalorder %s46, %s49
      %p58 = scmp.eq.s32.totalorder %s20, 1
      %p59 = por %p57, %p58
      %p60 = scmp.ne.s32.totalorder %s49, %s50
      %p61 = scmp.eq.s32.totalorder %s20, 0
      %p62 = por %p60, %p61
      %p63 = scmp.ne.s32.totalorder %s49, %s50
      %p64 = scmp.eq.s32.totalorder %s21, 1
      %p65 = por %p63, %p64
      %p67 = scmp.ne.s32.totalorder %s50, %s66
      %p68 = scmp.eq.s32.totalorder %s21, 0
      %p69 = por %p67, %p68
      %s70 = ssub.s32 %s15, %s22
      %p71 = scmp.eq.s32.totalorder %s70, 0
      %s73 = sadd.s32 %s72, 1
      %s74 = scalar_select %p71, %s72, %s73
      %p77 = pneg %p71
      %p78 = scmp.eq.s32.totalorder %s15, 1
      %p79 = por %p77, %p78
      %p80 = scmp.ne.s32.totalorder %s72, %s75
      %p81 = scmp.eq.s32.totalorder %s15, 0
      %p82 = por %p80, %p81
      %p83 = scmp.ne.s32.totalorder %s72, %s75
      %p84 = scmp.eq.s32.totalorder %s20, 1
      %p85 = por %p83, %p84
      %p86 = scmp.ne.s32.totalorder %s75, %s76
      %p87 = scmp.eq.s32.totalorder %s20, 0
      %p88 = por %p86, %p87
      %p89 = scmp.ne.s32.totalorder %s75, %s76
      %p90 = scmp.eq.s32.totalorder %s21, 1
      %p91 = por %p89, %p90
      %p93 = scmp.ne.s32.totalorder %s76, %s92
      %p94 = scmp.eq.s32.totalorder %s21, 0
      %p95 = por %p93, %p94
      %p96 = scmp.le.s32.totalorder 1, %s15
      %p97 = scmp.lt.s32.totalorder %s15, 3
      %p98 = pnand %p96, %p97
      %p99 = pneg %p98
      // Predicated region
      $region9: #{spatial_attention.1} parent=5 // pred_check
        _
      $region10: #{spatial_attention.1} parent=5 // pred_check_branch
        %101 = sbr.rel (%p98) target = $region12
      $region11: #{spatial_attention.1} parent=5 // pred_region
        %s102 = ssub.s32 %s15, 1
        // Predicated region
        $region13: #{spatial_attention.1} parent=11 // pred_check
          %p103 = pneg %p36
        $region14: #{spatial_attention.1} parent=11 // pred_check_branch
          %105 = sbr.rel (%p103) target = $region16
        $region15: #{spatial_attention.1} parent=11 // pred_region
          %107 = vsyncadd [#allocation6], 0
          %s109 = sshll.u32 %s0, 4
          %s110 = int_to_ptr.vmem [resolvable:$true] %s109
          %112 = dma.vmem_to_smem %s110, 16, [#allocation3], [#allocation6]
        $region16: #{spatial_attention.1} parent=11 // pred_fallthru
          _
      $region12: #{spatial_attention.1} parent=5 // pred_fallthru
        _
      %p113 = scmp.lt.s32.totalorder %s15, 2
      // Predicated region
      $region17: #{spatial_attention.1} parent=5 // pred_check
        %p114 = pneg %p113
      $region18: #{spatial_attention.1} parent=5 // pred_check_branch
        %116 = sbr.rel (%p114) target = $region20
      $region19: #{spatial_attention.1} parent=5 // pred_region
        // Predicated region
        $region21: #{spatial_attention.1} parent=19 // pred_check
          %p117 = pneg %p56
        $region22: #{spatial_attention.1} parent=19 // pred_check_branch
          %119 = sbr.rel (%p117) target = $region24
        $region23: #{spatial_attention.1} parent=19 // pred_region
          %s120 = sand.u32 %s46, 1
          %s121 = scalar_lea.sflag [#allocation4], %s120
          %s122 = sand.u32 %s46, 1
          %s123 = smul.addr %s122, 64
          %s124 = scalar_lea.vmem [#allocation7], %s123
          %126 = vsyncadd %s121, 0
          %s127 = smul.addr %s15, 8
          %s128 = smul.addr %s127, 8
          %s129 = scalar_lea.hbm %s1, %s128
          %s130 = sshll.u32 %s129, 4
          %s131 = int_to_ptr.hbm [resolvable:$true] %s130
          %s132 = sshll.u32 %s124, 4
          %s133 = int_to_ptr.vmem [resolvable:$true] %s132
          %138 = dma.hbm_to_vmem [thread:$0]  %s131, 1024, %s133, %s121, 128, 128, 8
        $region24: #{spatial_attention.1} parent=19 // pred_fallthru
          _
      $region20: #{spatial_attention.1} parent=5 // pred_fallthru
        _
      %p139 = scmp.le.s32.totalorder 1, %s15
      %p140 = scmp.lt.s32.totalorder %s15, 3
      %p141 = pnand %p139, %p140
      %p142 = pneg %p141
      // Predicated region
      $region25: #{spatial_attention.1} parent=5 // pred_check
        _
      $region26: #{spatial_attention.1} parent=5 // pred_check_branch
        %144 = sbr.rel (%p141) target = $region28
      $region27: #{spatial_attention.1} parent=5 // pred_region
        %s145 = ssub.s32 %s15, 1
        // Predicated region
        $region29: #{spatial_attention.1} parent=27 // pred_check
          %p146 = pneg %p36
        $region30: #{spatial_attention.1} parent=27 // pred_check_branch
          %148 = sbr.rel (%p146) target = $region32
        $region31: #{spatial_attention.1} parent=27 // pred_region
          %150 = dma.done [#allocation6], 16
        $region32: #{spatial_attention.1} parent=27 // pred_fallthru
          _
        %s151 = sand.u32 %s49, 1
        %s152 = scalar_lea.sflag [#allocation4], %s151
        %s153 = sand.u32 %s49, 1
        %s154 = smul.addr %s153, 64
        %s155 = scalar_lea.vmem [#allocation7], %s154
        // Predicated region
        $region33: #{spatial_attention.1} parent=27 // pred_check
          %p156 = pneg %p62
        $region34: #{spatial_attention.1} parent=27 // pred_check_branch
          %158 = sbr.rel (%p156) target = $region36
        $region35: #{spatial_attention.1} parent=27 // pred_region
          %160 = dma.done %s152, 1024
        $region36: #{spatial_attention.1} parent=27 // pred_fallthru
          _
        %161 = sfence
        %p162 = pneg %p36
        %p163 = pneg %p33
        %s164 = sand.u32 %s49, 1
        %s165 = scalar_lea.sflag [#allocation4], %s164
        %s166 = sand.u32 %s49, 1
        %s167 = smul.addr %s166, 64
        %s168 = scalar_lea.vmem [#allocation7], %s167
        %p169 = pneg %p62
        %p170 = pneg %p59
        %p171 = pneg %p88
        %p172 = pneg %p85
        %s173 = sand.u32 %s75, 1
        %s174 = scalar_lea.sflag [#allocation5], %s173
        %s175 = sand.u32 %s75, 1
        %s176 = smul.addr %s175, 64
        %s177 = scalar_lea.vmem [#allocation8], %s176
        %vm178 = vcmask 179200
        %179 = vst.msk [vmem:[#allocation2] sm:$0xff] %vm178, 0.0
        %180 = vst.msk [vmem:[#allocation2 + $0x8] sm:$0xff] %vm178, 0.0
        %vm181 = vcmask 177152
        %182 = vst.msk [vmem:[#allocation2 + $0x10] sm:$0x3f] %vm181, 0.0
        %183 = vst.msk [vmem:[#allocation2 + $0x18] sm:$0xff] %vm178, 0.0
        %184 = vst.msk [vmem:[#allocation2 + $0x20] sm:$0xff] %vm178, 0.0
        %185 = vst.msk [vmem:[#allocation2 + $0x28] sm:$0x3f] %vm181, 0.0
        %v186 = vld [vmem:[%s155] sm:$0xff]
        %v187 = vld [vmem:[%s155 + $0x8] sm:$0xff]
        %s188 = scalar_lea.vmem %s155, 16 [#allocation7]
        %v189 = vld [vmem:[%s188] sm:$0xff]
        %v190 = vld [vmem:[%s188 + $0x8] sm:$0xff]
        %v191 = vadd.f32 %v186, %v189
        %v192 = vadd.f32 %v187, %v190
        %v193 = vmax.f32 %v186, %v189
        %v194 = vmax.f32 %v187, %v190
        %s195 = scalar_lea.vmem %s155, 32 [#allocation7]
        %v196 = vld [vmem:[%s195] sm:$0xff]
        %v197 = vld [vmem:[%s195 + $0x8] sm:$0xff]
        %v198 = vadd.f32 %v191, %v196
        %v199 = vadd.f32 %v192, %v197
        %v200 = vmax.f32 %v193, %v196
        %v201 = vmax.f32 %v194, %v197
        %s202 = scalar_lea.vmem %s155, 48 [#allocation7]
        %v203 = vld [vmem:[%s202] sm:$0xff]
        %v204 = vld [vmem:[%s202 + $0x8] sm:$0xff]
        %v205 = vadd.f32 %v198, %v203
        %v206 = vadd.f32 %v199, %v204
        %v207 = vmax.f32 %v200, %v203
        %v208 = vmax.f32 %v201, %v204
        %211 = vrot.lane.b32.xlu0 %v205, 3
        %v212 = vpop.permute.xlu0 %211
        %213 = vrot.lane.b32.xlu0 %v206, 3
        %v214 = vpop.permute.xlu0 %213
        %vm217 = vcmask 154648
        %218 = vst.msk [vmem:[#allocation2 + $0x3] sm:$0xff] %vm217, %v212
        %219 = vst.msk [vmem:[#allocation2 + $0xb] sm:$0xff] %vm217, %v214
        %222 = vrot.lane.b32.xlu0 %v207, 3
        %v223 = vpop.permute.xlu0 %222
        %224 = vrot.lane.b32.xlu0 %v208, 3
        %v225 = vpop.permute.xlu0 %224
        %s228 = scalar_lea.vmem [#allocation2], 24
        %229 = vst.msk [vmem:[%s228 + $0x3] sm:$0xff] %vm217, %v223
        %230 = vst.msk [vmem:[%s228 + $0xb] sm:$0xff] %vm217, %v225
        %v231 = vld [vmem:[#allocation2] sm:$0xff]
        %v232 = vld [vmem:[#allocation2 + $0x8] sm:$0xff]
        %v233 = vld [vmem:[#allocation2 + $0x10] sm:$0x3f]
        %s234 = sld [smem:[#allocation3]]
        %v235 = vstv %s234
        %v236 = vmul.f32 %v235, %v231
        %v237 = vmul.f32 %v235, %v232
        %s238 = sld [smem:[#allocation3 + $0x7]]
        %v239 = vstv %s238
        %v240 = vmul.f32 %v239, %v231
        %v241 = vmul.f32 %v239, %v232
        %v242 = vmul.f32 %v239, %v233
        %s243 = sld [smem:[#allocation3 + $0xe]]
        %v244 = vstv %s243
        %v245 = vmul.f32 %v244, %v231
        %v246 = vmul.f32 %v244, %v232
        %v247 = vmul.f32 %v244, %v233
        %s248 = sld [smem:[#allocation3 + $0x15]]
        %v249 = vstv %s248
        %v250 = vmul.f32 %v249, %v231
        %v251 = vmul.f32 %v249, %v232
        %v252 = vmul.f32 %v249, %v233
        %s253 = sld [smem:[#allocation3 + $0x1c]]
        %v254 = vstv %s253
        %v255 = vmul.f32 %v254, %v231
        %v256 = vmul.f32 %v254, %v232
        %v257 = vmul.f32 %v254, %v233
        %vm261 = vcmask 1043456
        %v262 = vrot.slane %v255, 4
        %v263 = vrot.slane %v256, 4
        %v264 = vsel %vm261, %v262, %v263
        %v265 = vrot.slane %v257, 4
        %v266 = vsel %vm261, %v263, %v265
        %v269 = vadd.f32 %v236, %v264
        %v270 = vadd.f32 %v237, %v266
        %s271 = sld [smem:[#allocation3 + $0x23]]
        %v272 = vstv %s271
        %v273 = vmul.f32 %v272, %v231
        %v274 = vmul.f32 %v272, %v232
        %v275 = vmul.f32 %v272, %v233
        %v279 = vrot.slane %v273, 4
        %v280 = vrot.slane %v274, 4
        %v281 = vsel %vm261, %v279, %v280
        %v282 = vrot.slane %v275, 4
        %v283 = vsel %vm261, %v280, %v282
        %v287 = vadd.f32 %v240, %v281
        %v288 = vadd.f32 %v241, %v283
        %v289 = vadd.f32 %v242, %v282
        %s290 = sld [smem:[#allocation3 + $0x2a]]
        %v291 = vstv %s290
        %v292 = vmul.f32 %v291, %v231
        %v293 = vmul.f32 %v291, %v232
        %v294 = vmul.f32 %v291, %v233
        %v298 = vrot.slane %v292, 4
        %v299 = vrot.slane %v293, 4
        %v300 = vsel %vm261, %v298, %v299
        %v301 = vrot.slane %v294, 4
        %v302 = vsel %vm261, %v299, %v301
        %v306 = vadd.f32 %v245, %v300
        %v307 = vadd.f32 %v246, %v302
        %v308 = vadd.f32 %v247, %v301
        %s309 = sld [smem:[#allocation3 + $0x1]]
        %v310 = vstv %s309
        %v311 = vmul.f32 %v310, %v231
        %v312 = vmul.f32 %v310, %v232
        %vm315 = vcmask 1042432
        %v316 = vrot.slane %v311, 5
        %v317 = vrot.slane %v312, 5
        %v318 = vsel %vm315, %v316, %v317
        %319 = vrot.lane.b32.xlu0 %v316, 127
        %v320 = vpop.permute.xlu0 %319
        %321 = vrot.lane.b32.xlu0 %v318, 127
        %v322 = vpop.permute.xlu0 %321
        %323 = vrot.lane.b32.xlu0 %v317, 127
        %v324 = vpop.permute.xlu0 %323
        %v328 = vadd.f32 %v250, %v320
        %v329 = vadd.f32 %v251, %v322
        %v330 = vadd.f32 %v252, %v324
        %s331 = sld [smem:[#allocation3 + $0x8]]
        %v332 = vstv %s331
        %v333 = vmul.f32 %v332, %v231
        %v334 = vmul.f32 %v332, %v232
        %v335 = vmul.f32 %v332, %v233
        %vm339 = vcmask 1046528
        %v340 = vrot.slane %v333, 1
        %v341 = vrot.slane %v334, 1
        %v342 = vsel %vm339, %v340, %v341
        %v343 = vrot.slane %v335, 1
        %v344 = vsel %vm339, %v341, %v343
        %345 = vrot.lane.b32.xlu0 %v342, 127
        %v346 = vpop.permute.xlu0 %345
        %347 = vrot.lane.b32.xlu0 %v344, 127
        %v348 = vpop.permute.xlu0 %347
        %v351 = vadd.f32 %v269, %v346
        %v352 = vadd.f32 %v270, %v348
        %s353 = sld [smem:[#allocation3 + $0xf]]
        %v354 = vstv %s353
        %v355 = vmul.f32 %v354, %v231
        %v356 = vmul.f32 %v354, %v232
        %v357 = vmul.f32 %v354, %v233
        %v361 = vrot.slane %v355, 1
        %v362 = vrot.slane %v356, 1
        %v363 = vsel %vm339, %v361, %v362
        %v364 = vrot.slane %v357, 1
        %v365 = vsel %vm339, %v362, %v364
        %366 = vrot.lane.b32.xlu0 %v363, 127
        %v367 = vpop.permute.xlu0 %366
        %368 = vrot.lane.b32.xlu0 %v365, 127
        %v369 = vpop.permute.xlu0 %368
        %370 = vrot.lane.b32.xlu0 %v364, 127
        %v371 = vpop.permute.xlu0 %370
        %v375 = vadd.f32 %v287, %v367
        %v376 = vadd.f32 %v288, %v369
        %v377 = vadd.f32 %v289, %v371
        %s378 = sld [smem:[#allocation3 + $0x16]]
        %v379 = vstv %s378
        %v380 = vmul.f32 %v379, %v231
        %v381 = vmul.f32 %v379, %v232
        %v382 = vmul.f32 %v379, %v233
        %v386 = vrot.slane %v380, 1
        %v387 = vrot.slane %v381, 1
        %v388 = vsel %vm339, %v386, %v387
        %v389 = vrot.slane %v382, 1
        %v390 = vsel %vm339, %v387, %v389
        %391 = vrot.lane.b32.xlu0 %v388, 127
        %v392 = vpop.permute.xlu0 %391
        %393 = vrot.lane.b32.xlu0 %v390, 127
        %v394 = vpop.permute.xlu0 %393
        %395 = vrot.lane.b32.xlu0 %v389, 127
        %v396 = vpop.permute.xlu0 %395
        %v400 = vadd.f32 %v306, %v392
        %v401 = vadd.f32 %v307, %v394
        %v402 = vadd.f32 %v308, %v396
        %s403 = sld [smem:[#allocation3 + $0x1d]]
        %v404 = vstv %s403
        %v405 = vmul.f32 %v404, %v231
        %v406 = vmul.f32 %v404, %v232
        %v407 = vmul.f32 %v404, %v233
        %v411 = vrot.slane %v405, 1
        %v412 = vrot.slane %v406, 1
        %v413 = vsel %vm339, %v411, %v412
        %v414 = vrot.slane %v407, 1
        %v415 = vsel %vm339, %v412, %v414
        %416 = vrot.lane.b32.xlu0 %v413, 127
        %v417 = vpop.permute.xlu0 %416
        %418 = vrot.lane.b32.xlu0 %v415, 127
        %v419 = vpop.permute.xlu0 %418
        %420 = vrot.lane.b32.xlu0 %v414, 127
        %v421 = vpop.permute.xlu0 %420
        %v425 = vadd.f32 %v328, %v417
        %v426 = vadd.f32 %v329, %v419
        %v427 = vadd.f32 %v330, %v421
        %s428 = sld [smem:[#allocation3 + $0x24]]
        %v429 = vstv %s428
        %v430 = vmul.f32 %v429, %v231
        %v431 = vmul.f32 %v429, %v232
        %v432 = vmul.f32 %v429, %v233
        %v436 = vrot.slane %v430, 5
        %v437 = vrot.slane %v431, 5
        %v438 = vsel %vm315, %v436, %v437
        %v439 = vrot.slane %v432, 5
        %v440 = vsel %vm315, %v437, %v439
        %441 = vrot.lane.b32.xlu0 %v438, 127
        %v442 = vpop.permute.xlu0 %441
        %443 = vrot.lane.b32.xlu0 %v440, 127
        %v444 = vpop.permute.xlu0 %443
        %v447 = vadd.f32 %v351, %v442
        %v448 = vadd.f32 %v352, %v444
        %s449 = sld [smem:[#allocation3 + $0x2b]]
        %v450 = vstv %s449
        %v451 = vmul.f32 %v450, %v231
        %v452 = vmul.f32 %v450, %v232
        %v453 = vmul.f32 %v450, %v233
        %v457 = vrot.slane %v451, 5
        %v458 = vrot.slane %v452, 5
        %v459 = vsel %vm315, %v457, %v458
        %v460 = vrot.slane %v453, 5
        %v461 = vsel %vm315, %v458, %v460
        %462 = vrot.lane.b32.xlu0 %v459, 127
        %v463 = vpop.permute.xlu0 %462
        %464 = vrot.lane.b32.xlu0 %v461, 127
        %v465 = vpop.permute.xlu0 %464
        %466 = vrot.lane.b32.xlu0 %v460, 127
        %v467 = vpop.permute.xlu0 %466
        %v471 = vadd.f32 %v375, %v463
        %v472 = vadd.f32 %v376, %v465
        %v473 = vadd.f32 %v377, %v467
        %s474 = sld [smem:[#allocation3 + $0x2]]
        %v475 = vstv %s474
        %v476 = vmul.f32 %v475, %v231
        %v477 = vmul.f32 %v475, %v232
        %vm480 = vcmask 1041408
        %v481 = vrot.slane %v476, 6
        %v482 = vrot.slane %v477, 6
        %v483 = vsel %vm480, %v481, %v482
        %484 = vrot.lane.b32.xlu0 %v481, 126
        %v485 = vpop.permute.xlu0 %484
        %486 = vrot.lane.b32.xlu0 %v483, 126
        %v487 = vpop.permute.xlu0 %486
        %488 = vrot.lane.b32.xlu0 %v482, 126
        %v489 = vpop.permute.xlu0 %488
        %v493 = vadd.f32 %v400, %v485
        %v494 = vadd.f32 %v401, %v487
        %v495 = vadd.f32 %v402, %v489
        %s496 = sld [smem:[#allocation3 + $0x9]]
        %v497 = vstv %s496
        %v498 = vmul.f32 %v497, %v231
        %v499 = vmul.f32 %v497, %v232
        %v500 = vmul.f32 %v497, %v233
        %v504 = vrot.slane %v498, 6
        %v505 = vrot.slane %v499, 6
        %v506 = vsel %vm480, %v504, %v505
        %v507 = vrot.slane %v500, 6
        %v508 = vsel %vm480, %v505, %v507
        %509 = vrot.lane.b32.xlu0 %v504, 126
        %v510 = vpop.permute.xlu0 %509
        %511 = vrot.lane.b32.xlu0 %v506, 126
        %v512 = vpop.permute.xlu0 %511
        %513 = vrot.lane.b32.xlu0 %v508, 126
        %v514 = vpop.permute.xlu0 %513
        %v518 = vadd.f32 %v425, %v510
        %v519 = vadd.f32 %v426, %v512
        %v520 = vadd.f32 %v427, %v514
        %s521 = sld [smem:[#allocation3 + $0x10]]
        %v522 = vstv %s521
        %v523 = vmul.f32 %v522, %v231
        %v524 = vmul.f32 %v522, %v232
        %v525 = vmul.f32 %v522, %v233
        %vm529 = vcmask 1045504
        %v530 = vrot.slane %v523, 2
        %v531 = vrot.slane %v524, 2
        %v532 = vsel %vm529, %v530, %v531
        %v533 = vrot.slane %v525, 2
        %v534 = vsel %vm529, %v531, %v533
        %535 = vrot.lane.b32.xlu0 %v532, 126
        %v536 = vpop.permute.xlu0 %535
        %537 = vrot.lane.b32.xlu0 %v534, 126
        %v538 = vpop.permute.xlu0 %537
        %v541 = vadd.f32 %v447, %v536
        %v542 = vadd.f32 %v448, %v538
        %s543 = sld [smem:[#allocation3 + $0x17]]
        %v544 = vstv %s543
        %v545 = vmul.f32 %v544, %v231
        %v546 = vmul.f32 %v544, %v232
        %v547 = vmul.f32 %v544, %v233
        %v551 = vrot.slane %v545, 2
        %v552 = vrot.slane %v546, 2
        %v553 = vsel %vm529, %v551, %v552
        %v554 = vrot.slane %v547, 2
        %v555 = vsel %vm529, %v552, %v554
        %556 = vrot.lane.b32.xlu0 %v553, 126
        %v557 = vpop.permute.xlu0 %556
        %558 = vrot.lane.b32.xlu0 %v555, 126
        %v559 = vpop.permute.xlu0 %558
        %560 = vrot.lane.b32.xlu0 %v554, 126
        %v561 = vpop.permute.xlu0 %560
        %v565 = vadd.f32 %v471, %v557
        %v566 = vadd.f32 %v472, %v559
        %v567 = vadd.f32 %v473, %v561
        %s568 = sld [smem:[#allocation3 + $0x1e]]
        %v569 = vstv %s568
        %v570 = vmul.f32 %v569, %v231
        %v571 = vmul.f32 %v569, %v232
        %v572 = vmul.f32 %v569, %v233
        %v576 = vrot.slane %v570, 2
        %v577 = vrot.slane %v571, 2
        %v578 = vsel %vm529, %v576, %v577
        %v579 = vrot.slane %v572, 2
        %v580 = vsel %vm529, %v577, %v579
        %581 = vrot.lane.b32.xlu0 %v578, 126
        %v582 = vpop.permute.xlu0 %581
        %583 = vrot.lane.b32.xlu0 %v580, 126
        %v584 = vpop.permute.xlu0 %583
        %585 = vrot.lane.b32.xlu0 %v579, 126
        %v586 = vpop.permute.xlu0 %585
        %v590 = vadd.f32 %v493, %v582
        %v591 = vadd.f32 %v494, %v584
        %v592 = vadd.f32 %v495, %v586
        %s593 = sld [smem:[#allocation3 + $0x25]]
        %v594 = vstv %s593
        %v595 = vmul.f32 %v594, %v231
        %v596 = vmul.f32 %v594, %v232
        %v597 = vmul.f32 %v594, %v233
        %v601 = vrot.slane %v595, 2
        %v602 = vrot.slane %v596, 2
        %v603 = vsel %vm529, %v601, %v602
        %v604 = vrot.slane %v597, 2
        %v605 = vsel %vm529, %v602, %v604
        %606 = vrot.lane.b32.xlu0 %v603, 126
        %v607 = vpop.permute.xlu0 %606
        %608 = vrot.lane.b32.xlu0 %v605, 126
        %v609 = vpop.permute.xlu0 %608
        %610 = vrot.lane.b32.xlu0 %v604, 126
        %v611 = vpop.permute.xlu0 %610
        %v615 = vadd.f32 %v518, %v607
        %v616 = vadd.f32 %v519, %v609
        %v617 = vadd.f32 %v520, %v611
        %s618 = sld [smem:[#allocation3 + $0x2c]]
        %v619 = vstv %s618
        %v620 = vmul.f32 %v619, %v231
        %v621 = vmul.f32 %v619, %v232
        %v622 = vmul.f32 %v619, %v233
        %v626 = vrot.slane %v620, 6
        %v627 = vrot.slane %v621, 6
        %v628 = vsel %vm480, %v626, %v627
        %v629 = vrot.slane %v622, 6
        %v630 = vsel %vm480, %v627, %v629
        %631 = vrot.lane.b32.xlu0 %v628, 126
        %v632 = vpop.permute.xlu0 %631
        %633 = vrot.lane.b32.xlu0 %v630, 126
        %v634 = vpop.permute.xlu0 %633
        %v637 = vadd.f32 %v541, %v632
        %v638 = vadd.f32 %v542, %v634
        %s639 = sld [smem:[#allocation3 + $0x3]]
        %v640 = vstv %s639
        %v641 = vmul.f32 %v640, %v231
        %v642 = vmul.f32 %v640, %v232
        %vm645 = vcmask 1040384
        %v646 = vrot.slane %v641, 7
        %v647 = vrot.slane %v642, 7
        %v648 = vsel %vm645, %v646, %v647
        %649 = vrot.lane.b32.xlu0 %v646, 125
        %v650 = vpop.permute.xlu0 %649
        %651 = vrot.lane.b32.xlu0 %v648, 125
        %v652 = vpop.permute.xlu0 %651
        %653 = vrot.lane.b32.xlu0 %v647, 125
        %v654 = vpop.permute.xlu0 %653
        %v658 = vadd.f32 %v565, %v650
        %v659 = vadd.f32 %v566, %v652
        %v660 = vadd.f32 %v567, %v654
        %s661 = sld [smem:[#allocation3 + $0xa]]
        %v662 = vstv %s661
        %v663 = vmul.f32 %v662, %v231
        %v664 = vmul.f32 %v662, %v232
        %v665 = vmul.f32 %v662, %v233
        %v669 = vrot.slane %v663, 7
        %v670 = vrot.slane %v664, 7
        %v671 = vsel %vm645, %v669, %v670
        %v672 = vrot.slane %v665, 7
        %v673 = vsel %vm645, %v670, %v672
        %674 = vrot.lane.b32.xlu0 %v669, 125
        %v675 = vpop.permute.xlu0 %674
        %676 = vrot.lane.b32.xlu0 %v671, 125
        %v677 = vpop.permute.xlu0 %676
        %678 = vrot.lane.b32.xlu0 %v673, 125
        %v679 = vpop.permute.xlu0 %678
        %v683 = vadd.f32 %v590, %v675
        %v684 = vadd.f32 %v591, %v677
        %v685 = vadd.f32 %v592, %v679
        %s686 = sld [smem:[#allocation3 + $0x11]]
        %v687 = vstv %s686
        %v688 = vmul.f32 %v687, %v231
        %v689 = vmul.f32 %v687, %v232
        %v690 = vmul.f32 %v687, %v233
        %v694 = vrot.slane %v688, 7
        %v695 = vrot.slane %v689, 7
        %v696 = vsel %vm645, %v694, %v695
        %v697 = vrot.slane %v690, 7
        %v698 = vsel %vm645, %v695, %v697
        %699 = vrot.lane.b32.xlu0 %v694, 125
        %v700 = vpop.permute.xlu0 %699
        %701 = vrot.lane.b32.xlu0 %v696, 125
        %v702 = vpop.permute.xlu0 %701
        %703 = vrot.lane.b32.xlu0 %v698, 125
        %v704 = vpop.permute.xlu0 %703
        %v708 = vadd.f32 %v615, %v700
        %v709 = vadd.f32 %v616, %v702
        %v710 = vadd.f32 %v617, %v704
        %s711 = sld [smem:[#allocation3 + $0x18]]
        %v712 = vstv %s711
        %v713 = vmul.f32 %v712, %v231
        %v714 = vmul.f32 %v712, %v232
        %v715 = vmul.f32 %v712, %v233
        %vm719 = vcmask 1044480
        %v720 = vrot.slane %v713, 3
        %v721 = vrot.slane %v714, 3
        %v722 = vsel %vm719, %v720, %v721
        %v723 = vrot.slane %v715, 3
        %v724 = vsel %vm719, %v721, %v723
        %725 = vrot.lane.b32.xlu0 %v722, 125
        %v726 = vpop.permute.xlu0 %725
        %727 = vrot.lane.b32.xlu0 %v724, 125
        %v728 = vpop.permute.xlu0 %727
        %v731 = vadd.f32 %v637, %v726
        %v732 = vadd.f32 %v638, %v728
        %s733 = sld [smem:[#allocation3 + $0x1f]]
        %v734 = vstv %s733
        %v735 = vmul.f32 %v734, %v231
        %v736 = vmul.f32 %v734, %v232
        %v737 = vmul.f32 %v734, %v233
        %v741 = vrot.slane %v735, 3
        %v742 = vrot.slane %v736, 3
        %v743 = vsel %vm719, %v741, %v742
        %v744 = vrot.slane %v737, 3
        %v745 = vsel %vm719, %v742, %v744
        %746 = vrot.lane.b32.xlu0 %v743, 125
        %v747 = vpop.permute.xlu0 %746
        %748 = vrot.lane.b32.xlu0 %v745, 125
        %v749 = vpop.permute.xlu0 %748
        %750 = vrot.lane.b32.xlu0 %v744, 125
        %v751 = vpop.permute.xlu0 %750
        %v755 = vadd.f32 %v658, %v747
        %v756 = vadd.f32 %v659, %v749
        %v757 = vadd.f32 %v660, %v751
        %s758 = sld [smem:[#allocation3 + $0x26]]
        %v759 = vstv %s758
        %v760 = vmul.f32 %v759, %v231
        %v761 = vmul.f32 %v759, %v232
        %v762 = vmul.f32 %v759, %v233
        %v766 = vrot.slane %v760, 3
        %v767 = vrot.slane %v761, 3
        %v768 = vsel %vm719, %v766, %v767
        %v769 = vrot.slane %v762, 3
        %v770 = vsel %vm719, %v767, %v769
        %771 = vrot.lane.b32.xlu0 %v768, 125
        %v772 = vpop.permute.xlu0 %771
        %773 = vrot.lane.b32.xlu0 %v770, 125
        %v774 = vpop.permute.xlu0 %773
        %775 = vrot.lane.b32.xlu0 %v769, 125
        %v776 = vpop.permute.xlu0 %775
        %v780 = vadd.f32 %v683, %v772
        %v781 = vadd.f32 %v684, %v774
        %v782 = vadd.f32 %v685, %v776
        %s783 = sld [smem:[#allocation3 + $0x2d]]
        %v784 = vstv %s783
        %v785 = vmul.f32 %v784, %v231
        %v786 = vmul.f32 %v784, %v232
        %v787 = vmul.f32 %v784, %v233
        %v791 = vrot.slane %v785, 3
        %v792 = vrot.slane %v786, 3
        %v793 = vsel %vm719, %v791, %v792
        %v794 = vrot.slane %v787, 3
        %v795 = vsel %vm719, %v792, %v794
        %796 = vrot.lane.b32.xlu0 %v793, 125
        %v797 = vpop.permute.xlu0 %796
        %798 = vrot.lane.b32.xlu0 %v795, 125
        %v799 = vpop.permute.xlu0 %798
        %800 = vrot.lane.b32.xlu0 %v794, 125
        %v801 = vpop.permute.xlu0 %800
        %v805 = vadd.f32 %v708, %v797
        %v806 = vadd.f32 %v709, %v799
        %v807 = vadd.f32 %v710, %v801
        %s808 = sld [smem:[#allocation3 + $0x4]]
        %v809 = vstv %s808
        %v810 = vmul.f32 %v809, %v231
        %v811 = vmul.f32 %v809, %v232
        %814 = vrot.lane.b32.xlu0 %v810, 124
        %v815 = vpop.permute.xlu0 %814
        %816 = vrot.lane.b32.xlu0 %v811, 124
        %v817 = vpop.permute.xlu0 %816
        %v820 = vadd.f32 %v731, %v815
        %v821 = vadd.f32 %v732, %v817
        %s822 = sld [smem:[#allocation3 + $0xb]]
        %v823 = vstv %s822
        %v824 = vmul.f32 %v823, %v231
        %v825 = vmul.f32 %v823, %v232
        %v826 = vmul.f32 %v823, %v233
        %830 = vrot.lane.b32.xlu0 %v824, 124
        %v831 = vpop.permute.xlu0 %830
        %832 = vrot.lane.b32.xlu0 %v825, 124
        %v833 = vpop.permute.xlu0 %832
        %834 = vrot.lane.b32.xlu0 %v826, 124
        %v835 = vpop.permute.xlu0 %834
        %v839 = vadd.f32 %v755, %v831
        %v840 = vadd.f32 %v756, %v833
        %v841 = vadd.f32 %v757, %v835
        %s842 = sld [smem:[#allocation3 + $0x12]]
        %v843 = vstv %s842
        %v844 = vmul.f32 %v843, %v231
        %v845 = vmul.f32 %v843, %v232
        %v846 = vmul.f32 %v843, %v233
        %850 = vrot.lane.b32.xlu0 %v844, 124
        %v851 = vpop.permute.xlu0 %850
        %852 = vrot.lane.b32.xlu0 %v845, 124
        %v853 = vpop.permute.xlu0 %852
        %854 = vrot.lane.b32.xlu0 %v846, 124
        %v855 = vpop.permute.xlu0 %854
        %v859 = vadd.f32 %v780, %v851
        %v860 = vadd.f32 %v781, %v853
        %v861 = vadd.f32 %v782, %v855
        %s862 = sld [smem:[#allocation3 + $0x19]]
        %v863 = vstv %s862
        %v864 = vmul.f32 %v863, %v231
        %v865 = vmul.f32 %v863, %v232
        %v866 = vmul.f32 %v863, %v233
        %870 = vrot.lane.b32.xlu0 %v864, 124
        %v871 = vpop.permute.xlu0 %870
        %872 = vrot.lane.b32.xlu0 %v865, 124
        %v873 = vpop.permute.xlu0 %872
        %874 = vrot.lane.b32.xlu0 %v866, 124
        %v875 = vpop.permute.xlu0 %874
        %v879 = vadd.f32 %v805, %v871
        %v880 = vadd.f32 %v806, %v873
        %v881 = vadd.f32 %v807, %v875
        %s882 = sld [smem:[#allocation3 + $0x20]]
        %v883 = vstv %s882
        %v884 = vmul.f32 %v883, %v231
        %v885 = vmul.f32 %v883, %v232
        %v886 = vmul.f32 %v883, %v233
        %v890 = vrot.slane %v884, 4
        %v891 = vrot.slane %v885, 4
        %v892 = vsel %vm261, %v890, %v891
        %v893 = vrot.slane %v886, 4
        %v894 = vsel %vm261, %v891, %v893
        %895 = vrot.lane.b32.xlu0 %v892, 124
        %v896 = vpop.permute.xlu0 %895
        %897 = vrot.lane.b32.xlu0 %v894, 124
        %v898 = vpop.permute.xlu0 %897
        %v901 = vadd.f32 %v820, %v896
        %v902 = vadd.f32 %v821, %v898
        %s903 = sld [smem:[#allocation3 + $0x27]]
        %v904 = vstv %s903
        %v905 = vmul.f32 %v904, %v231
        %v906 = vmul.f32 %v904, %v232
        %v907 = vmul.f32 %v904, %v233
        %v911 = vrot.slane %v905, 4
        %v912 = vrot.slane %v906, 4
        %v913 = vsel %vm261, %v911, %v912
        %v914 = vrot.slane %v907, 4
        %v915 = vsel %vm261, %v912, %v914
        %916 = vrot.lane.b32.xlu0 %v913, 124
        %v917 = vpop.permute.xlu0 %916
        %918 = vrot.lane.b32.xlu0 %v915, 124
        %v919 = vpop.permute.xlu0 %918
        %920 = vrot.lane.b32.xlu0 %v914, 124
        %v921 = vpop.permute.xlu0 %920
        %v925 = vadd.f32 %v839, %v917
        %v926 = vadd.f32 %v840, %v919
        %v927 = vadd.f32 %v841, %v921
        %s928 = sld [smem:[#allocation3 + $0x2e]]
        %v929 = vstv %s928
        %v930 = vmul.f32 %v929, %v231
        %v931 = vmul.f32 %v929, %v232
        %v932 = vmul.f32 %v929, %v233
        %v936 = vrot.slane %v930, 4
        %v937 = vrot.slane %v931, 4
        %v938 = vsel %vm261, %v936, %v937
        %v939 = vrot.slane %v932, 4
        %v940 = vsel %vm261, %v937, %v939
        %941 = vrot.lane.b32.xlu0 %v938, 124
        %v942 = vpop.permute.xlu0 %941
        %943 = vrot.lane.b32.xlu0 %v940, 124
        %v944 = vpop.permute.xlu0 %943
        %945 = vrot.lane.b32.xlu0 %v939, 124
        %v946 = vpop.permute.xlu0 %945
        %v950 = vadd.f32 %v859, %v942
        %v951 = vadd.f32 %v860, %v944
        %v952 = vadd.f32 %v861, %v946
        %s953 = sld [smem:[#allocation3 + $0x5]]
        %v954 = vstv %s953
        %v955 = vmul.f32 %v954, %v231
        %v956 = vmul.f32 %v954, %v232
        %v959 = vrot.slane %v955, 5
        %v960 = vrot.slane %v956, 5
        %v961 = vsel %vm315, %v959, %v960
        %962 = vrot.lane.b32.xlu0 %v959, 123
        %v963 = vpop.permute.xlu0 %962
        %964 = vrot.lane.b32.xlu0 %v961, 123
        %v965 = vpop.permute.xlu0 %964
        %966 = vrot.lane.b32.xlu0 %v960, 123
        %v967 = vpop.permute.xlu0 %966
        %v971 = vadd.f32 %v879, %v963
        %v972 = vadd.f32 %v880, %v965
        %v973 = vadd.f32 %v881, %v967
        %s974 = sld [smem:[#allocation3 + $0xc]]
        %v975 = vstv %s974
        %v976 = vmul.f32 %v975, %v231
        %v977 = vmul.f32 %v975, %v232
        %v978 = vmul.f32 %v975, %v233
        %v982 = vrot.slane %v976, 1
        %v983 = vrot.slane %v977, 1
        %v984 = vsel %vm339, %v982, %v983
        %v985 = vrot.slane %v978, 1
        %v986 = vsel %vm339, %v983, %v985
        %987 = vrot.lane.b32.xlu0 %v984, 123
        %v988 = vpop.permute.xlu0 %987
        %989 = vrot.lane.b32.xlu0 %v986, 123
        %v990 = vpop.permute.xlu0 %989
        %v993 = vadd.f32 %v901, %v988
        %v994 = vadd.f32 %v902, %v990
        %s995 = sld [smem:[#allocation3 + $0x13]]
        %v996 = vstv %s995
        %v997 = vmul.f32 %v996, %v231
        %v998 = vmul.f32 %v996, %v232
        %v999 = vmul.f32 %v996, %v233
        %v1003 = vrot.slane %v997, 1
        %v1004 = vrot.slane %v998, 1
        %v1005 = vsel %vm339, %v1003, %v1004
        %v1006 = vrot.slane %v999, 1
        %v1007 = vsel %vm339, %v1004, %v1006
        %1008 = vrot.lane.b32.xlu0 %v1005, 123
        %v1009 = vpop.permute.xlu0 %1008
        %1010 = vrot.lane.b32.xlu0 %v1007, 123
        %v1011 = vpop.permute.xlu0 %1010
        %1012 = vrot.lane.b32.xlu0 %v1006, 123
        %v1013 = vpop.permute.xlu0 %1012
        %v1017 = vadd.f32 %v925, %v1009
        %v1018 = vadd.f32 %v926, %v1011
        %v1019 = vadd.f32 %v927, %v1013
        %s1020 = sld [smem:[#allocation3 + $0x1a]]
        %v1021 = vstv %s1020
        %v1022 = vmul.f32 %v1021, %v231
        %v1023 = vmul.f32 %v1021, %v232
        %v1024 = vmul.f32 %v1021, %v233
        %v1028 = vrot.slane %v1022, 1
        %v1029 = vrot.slane %v1023, 1
        %v1030 = vsel %vm339, %v1028, %v1029
        %v1031 = vrot.slane %v1024, 1
        %v1032 = vsel %vm339, %v1029, %v1031
        %1033 = vrot.lane.b32.xlu0 %v1030, 123
        %v1034 = vpop.permute.xlu0 %1033
        %1035 = vrot.lane.b32.xlu0 %v1032, 123
        %v1036 = vpop.permute.xlu0 %1035
        %1037 = vrot.lane.b32.xlu0 %v1031, 123
        %v1038 = vpop.permute.xlu0 %1037
        %v1042 = vadd.f32 %v950, %v1034
        %v1043 = vadd.f32 %v951, %v1036
        %v1044 = vadd.f32 %v952, %v1038
        %s1045 = sld [smem:[#allocation3 + $0x21]]
        %v1046 = vstv %s1045
        %v1047 = vmul.f32 %v1046, %v231
        %v1048 = vmul.f32 %v1046, %v232
        %v1049 = vmul.f32 %v1046, %v233
        %v1053 = vrot.slane %v1047, 1
        %v1054 = vrot.slane %v1048, 1
        %v1055 = vsel %vm339, %v1053, %v1054
        %v1056 = vrot.slane %v1049, 1
        %v1057 = vsel %vm339, %v1054, %v1056
        %1058 = vrot.lane.b32.xlu0 %v1055, 123
        %v1059 = vpop.permute.xlu0 %1058
        %1060 = vrot.lane.b32.xlu0 %v1057, 123
        %v1061 = vpop.permute.xlu0 %1060
        %1062 = vrot.lane.b32.xlu0 %v1056, 123
        %v1063 = vpop.permute.xlu0 %1062
        %v1067 = vadd.f32 %v971, %v1059
        %v1068 = vadd.f32 %v972, %v1061
        %v1069 = vadd.f32 %v973, %v1063
        %s1070 = sld [smem:[#allocation3 + $0x28]]
        %v1071 = vstv %s1070
        %v1072 = vmul.f32 %v1071, %v231
        %v1073 = vmul.f32 %v1071, %v232
        %v1074 = vmul.f32 %v1071, %v233
        %v1078 = vrot.slane %v1072, 5
        %v1079 = vrot.slane %v1073, 5
        %v1080 = vsel %vm315, %v1078, %v1079
        %v1081 = vrot.slane %v1074, 5
        %v1082 = vsel %vm315, %v1079, %v1081
        %1083 = vrot.lane.b32.xlu0 %v1080, 123
        %v1084 = vpop.permute.xlu0 %1083
        %1085 = vrot.lane.b32.xlu0 %v1082, 123
        %v1086 = vpop.permute.xlu0 %1085
        %v1089 = vadd.f32 %v993, %v1084
        %v1090 = vadd.f32 %v994, %v1086
        %s1091 = sld [smem:[#allocation3 + $0x2f]]
        %v1092 = vstv %s1091
        %v1093 = vmul.f32 %v1092, %v231
        %v1094 = vmul.f32 %v1092, %v232
        %v1095 = vmul.f32 %v1092, %v233
        %v1099 = vrot.slane %v1093, 5
        %v1100 = vrot.slane %v1094, 5
        %v1101 = vsel %vm315, %v1099, %v1100
        %v1102 = vrot.slane %v1095, 5
        %v1103 = vsel %vm315, %v1100, %v1102
        %1104 = vrot.lane.b32.xlu0 %v1101, 123
        %v1105 = vpop.permute.xlu0 %1104
        %1106 = vrot.lane.b32.xlu0 %v1103, 123
        %v1107 = vpop.permute.xlu0 %1106
        %1108 = vrot.lane.b32.xlu0 %v1102, 123
        %v1109 = vpop.permute.xlu0 %1108
        %v1113 = vadd.f32 %v1017, %v1105
        %v1114 = vadd.f32 %v1018, %v1107
        %v1115 = vadd.f32 %v1019, %v1109
        %s1116 = sld [smem:[#allocation3 + $0x6]]
        %v1117 = vstv %s1116
        %v1118 = vmul.f32 %v1117, %v231
        %v1119 = vmul.f32 %v1117, %v232
        %v1122 = vrot.slane %v1118, 6
        %v1123 = vrot.slane %v1119, 6
        %v1124 = vsel %vm480, %v1122, %v1123
        %1125 = vrot.lane.b32.xlu0 %v1122, 122
        %v1126 = vpop.permute.xlu0 %1125
        %1127 = vrot.lane.b32.xlu0 %v1124, 122
        %v1128 = vpop.permute.xlu0 %1127
        %1129 = vrot.lane.b32.xlu0 %v1123, 122
        %v1130 = vpop.permute.xlu0 %1129
        %v1134 = vadd.f32 %v1042, %v1126
        %v1135 = vadd.f32 %v1043, %v1128
        %v1136 = vadd.f32 %v1044, %v1130
        %s1137 = sld [smem:[#allocation3 + $0xd]]
        %v1138 = vstv %s1137
        %v1139 = vmul.f32 %v1138, %v231
        %v1140 = vmul.f32 %v1138, %v232
        %v1141 = vmul.f32 %v1138, %v233
        %v1145 = vrot.slane %v1139, 6
        %v1146 = vrot.slane %v1140, 6
        %v1147 = vsel %vm480, %v1145, %v1146
        %v1148 = vrot.slane %v1141, 6
        %v1149 = vsel %vm480, %v1146, %v1148
        %1150 = vrot.lane.b32.xlu0 %v1145, 122
        %v1151 = vpop.permute.xlu0 %1150
        %1152 = vrot.lane.b32.xlu0 %v1147, 122
        %v1153 = vpop.permute.xlu0 %1152
        %1154 = vrot.lane.b32.xlu0 %v1149, 122
        %v1155 = vpop.permute.xlu0 %1154
        %v1159 = vadd.f32 %v1067, %v1151
        %v1160 = vadd.f32 %v1068, %v1153
        %v1161 = vadd.f32 %v1069, %v1155
        %s1162 = sld [smem:[#allocation3 + $0x14]]
        %v1163 = vstv %s1162
        %v1164 = vmul.f32 %v1163, %v231
        %v1165 = vmul.f32 %v1163, %v232
        %v1166 = vmul.f32 %v1163, %v233
        %v1170 = vrot.slane %v1164, 2
        %v1171 = vrot.slane %v1165, 2
        %v1172 = vsel %vm529, %v1170, %v1171
        %v1173 = vrot.slane %v1166, 2
        %v1174 = vsel %vm529, %v1171, %v1173
        %1175 = vrot.lane.b32.xlu0 %v1172, 122
        %v1176 = vpop.permute.xlu0 %1175
        %1177 = vrot.lane.b32.xlu0 %v1174, 122
        %v1178 = vpop.permute.xlu0 %1177
        %v1181 = vadd.f32 %v1089, %v1176
        %v1182 = vadd.f32 %v1090, %v1178
        %s1183 = sld [smem:[#allocation3 + $0x1b]]
        %v1184 = vstv %s1183
        %v1185 = vmul.f32 %v1184, %v231
        %v1186 = vmul.f32 %v1184, %v232
        %v1187 = vmul.f32 %v1184, %v233
        %v1191 = vrot.slane %v1185, 2
        %v1192 = vrot.slane %v1186, 2
        %v1193 = vsel %vm529, %v1191, %v1192
        %v1194 = vrot.slane %v1187, 2
        %v1195 = vsel %vm529, %v1192, %v1194
        %1196 = vrot.lane.b32.xlu0 %v1193, 122
        %v1197 = vpop.permute.xlu0 %1196
        %1198 = vrot.lane.b32.xlu0 %v1195, 122
        %v1199 = vpop.permute.xlu0 %1198
        %1200 = vrot.lane.b32.xlu0 %v1194, 122
        %v1201 = vpop.permute.xlu0 %1200
        %v1205 = vadd.f32 %v1113, %v1197
        %v1206 = vadd.f32 %v1114, %v1199
        %v1207 = vadd.f32 %v1115, %v1201
        %s1208 = sld [smem:[#allocation3 + $0x22]]
        %v1209 = vstv %s1208
        %v1210 = vmul.f32 %v1209, %v231
        %v1211 = vmul.f32 %v1209, %v232
        %v1212 = vmul.f32 %v1209, %v233
        %v1216 = vrot.slane %v1210, 2
        %v1217 = vrot.slane %v1211, 2
        %v1218 = vsel %vm529, %v1216, %v1217
        %v1219 = vrot.slane %v1212, 2
        %v1220 = vsel %vm529, %v1217, %v1219
        %1221 = vrot.lane.b32.xlu0 %v1218, 122
        %v1222 = vpop.permute.xlu0 %1221
        %1223 = vrot.lane.b32.xlu0 %v1220, 122
        %v1224 = vpop.permute.xlu0 %1223
        %1225 = vrot.lane.b32.xlu0 %v1219, 122
        %v1226 = vpop.permute.xlu0 %1225
        %v1230 = vadd.f32 %v1134, %v1222
        %v1231 = vadd.f32 %v1135, %v1224
        %v1232 = vadd.f32 %v1136, %v1226
        %s1233 = sld [smem:[#allocation3 + $0x29]]
        %v1234 = vstv %s1233
        %v1235 = vmul.f32 %v1234, %v231
        %v1236 = vmul.f32 %v1234, %v232
        %v1237 = vmul.f32 %v1234, %v233
        %v1241 = vrot.slane %v1235, 2
        %v1242 = vrot.slane %v1236, 2
        %v1243 = vsel %vm529, %v1241, %v1242
        %v1244 = vrot.slane %v1237, 2
        %v1245 = vsel %vm529, %v1242, %v1244
        %1246 = vrot.lane.b32.xlu0 %v1243, 122
        %v1247 = vpop.permute.xlu0 %1246
        %1248 = vrot.lane.b32.xlu0 %v1245, 122
        %v1249 = vpop.permute.xlu0 %1248
        %1250 = vrot.lane.b32.xlu0 %v1244, 122
        %v1251 = vpop.permute.xlu0 %1250
        %v1255 = vadd.f32 %v1159, %v1247
        %v1256 = vadd.f32 %v1160, %v1249
        %v1257 = vadd.f32 %v1161, %v1251
        %s1258 = sld [smem:[#allocation3 + $0x30]]
        %v1259 = vstv %s1258
        %v1260 = vmul.f32 %v1259, %v231
        %v1261 = vmul.f32 %v1259, %v232
        %v1262 = vmul.f32 %v1259, %v233
        %v1266 = vrot.slane %v1260, 6
        %v1267 = vrot.slane %v1261, 6
        %v1268 = vsel %vm480, %v1266, %v1267
        %v1269 = vrot.slane %v1262, 6
        %v1270 = vsel %vm480, %v1267, %v1269
        %1271 = vrot.lane.b32.xlu0 %v1268, 122
        %v1272 = vpop.permute.xlu0 %1271
        %1273 = vrot.lane.b32.xlu0 %v1270, 122
        %v1274 = vpop.permute.xlu0 %1273
        %v1277 = vadd.f32 %v1181, %v1272
        %v1278 = vadd.f32 %v1182, %v1274
        %v1279 = vld [vmem:[%s228] sm:$0xff]
        %v1280 = vld [vmem:[%s228 + $0x8] sm:$0xff]
        %v1281 = vld [vmem:[%s228 + $0x10] sm:$0x3f]
        %s1282 = sld [smem:[#allocation3 + $0x31]]
        %v1283 = vstv %s1282
        %v1284 = vmul.f32 %v1283, %v1279
        %v1285 = vmul.f32 %v1283, %v1280
        %v1288 = vrot.slane %v1284, 7
        %v1289 = vrot.slane %v1285, 7
        %v1290 = vsel %vm645, %v1288, %v1289
        %v1294 = vadd.f32 %v1205, %v1288
        %v1295 = vadd.f32 %v1206, %v1290
        %v1296 = vadd.f32 %v1207, %v1289
        %s1297 = sld [smem:[#allocation3 + $0x38]]
        %v1298 = vstv %s1297
        %v1299 = vmul.f32 %v1298, %v1279
        %v1300 = vmul.f32 %v1298, %v1280
        %v1301 = vmul.f32 %v1298, %v1281
        %v1305 = vrot.slane %v1299, 7
        %v1306 = vrot.slane %v1300, 7
        %v1307 = vsel %vm645, %v1305, %v1306
        %v1308 = vrot.slane %v1301, 7
        %v1309 = vsel %vm645, %v1306, %v1308
        %v1313 = vadd.f32 %v1230, %v1305
        %v1314 = vadd.f32 %v1231, %v1307
        %v1315 = vadd.f32 %v1232, %v1309
        %s1316 = sld [smem:[#allocation3 + $0x3f]]
        %v1317 = vstv %s1316
        %v1318 = vmul.f32 %v1317, %v1279
        %v1319 = vmul.f32 %v1317, %v1280
        %v1320 = vmul.f32 %v1317, %v1281
        %v1324 = vrot.slane %v1318, 7
        %v1325 = vrot.slane %v1319, 7
        %v1326 = vsel %vm645, %v1324, %v1325
        %v1327 = vrot.slane %v1320, 7
        %v1328 = vsel %vm645, %v1325, %v1327
        %v1332 = vadd.f32 %v1255, %v1324
        %v1333 = vadd.f32 %v1256, %v1326
        %v1334 = vadd.f32 %v1257, %v1328
        %s1335 = sld [smem:[#allocation3 + $0x46]]
        %v1336 = vstv %s1335
        %v1337 = vmul.f32 %v1336, %v1279
        %v1338 = vmul.f32 %v1336, %v1280
        %v1339 = vmul.f32 %v1336, %v1281
        %v1343 = vrot.slane %v1337, 3
        %v1344 = vrot.slane %v1338, 3
        %v1345 = vsel %vm719, %v1343, %v1344
        %v1346 = vrot.slane %v1339, 3
        %v1347 = vsel %vm719, %v1344, %v1346
        %v1350 = vadd.f32 %v1277, %v1345
        %v1351 = vadd.f32 %v1278, %v1347
        %s1352 = sld [smem:[#allocation3 + $0x4d]]
        %v1353 = vstv %s1352
        %v1354 = vmul.f32 %v1353, %v1279
        %v1355 = vmul.f32 %v1353, %v1280
        %v1356 = vmul.f32 %v1353, %v1281
        %v1360 = vrot.slane %v1354, 3
        %v1361 = vrot.slane %v1355, 3
        %v1362 = vsel %vm719, %v1360, %v1361
        %v1363 = vrot.slane %v1356, 3
        %v1364 = vsel %vm719, %v1361, %v1363
        %v1368 = vadd.f32 %v1294, %v1362
        %v1369 = vadd.f32 %v1295, %v1364
        %v1370 = vadd.f32 %v1296, %v1363
        %s1371 = sld [smem:[#allocation3 + $0x54]]
        %v1372 = vstv %s1371
        %v1373 = vmul.f32 %v1372, %v1279
        %v1374 = vmul.f32 %v1372, %v1280
        %v1375 = vmul.f32 %v1372, %v1281
        %v1379 = vrot.slane %v1373, 3
        %v1380 = vrot.slane %v1374, 3
        %v1381 = vsel %vm719, %v1379, %v1380
        %v1382 = vrot.slane %v1375, 3
        %v1383 = vsel %vm719, %v1380, %v1382
        %v1387 = vadd.f32 %v1313, %v1381
        %v1388 = vadd.f32 %v1314, %v1383
        %v1389 = vadd.f32 %v1315, %v1382
        %s1390 = sld [smem:[#allocation3 + $0x5b]]
        %v1391 = vstv %s1390
        %v1392 = vmul.f32 %v1391, %v1279
        %v1393 = vmul.f32 %v1391, %v1280
        %v1394 = vmul.f32 %v1391, %v1281
        %v1398 = vrot.slane %v1392, 3
        %v1399 = vrot.slane %v1393, 3
        %v1400 = vsel %vm719, %v1398, %v1399
        %v1401 = vrot.slane %v1394, 3
        %v1402 = vsel %vm719, %v1399, %v1401
        %v1406 = vadd.f32 %v1332, %v1400
        %v1407 = vadd.f32 %v1333, %v1402
        %v1408 = vadd.f32 %v1334, %v1401
        %s1409 = sld [smem:[#allocation3 + $0x32]]
        %v1410 = vstv %s1409
        %v1411 = vmul.f32 %v1410, %v1279
        %v1412 = vmul.f32 %v1410, %v1280
        %1415 = vrot.lane.b32.xlu0 %v1411, 127
        %v1416 = vpop.permute.xlu0 %1415
        %1417 = vrot.lane.b32.xlu0 %v1412, 127
        %v1418 = vpop.permute.xlu0 %1417
        %v1421 = vadd.f32 %v1350, %v1416
        %v1422 = vadd.f32 %v1351, %v1418
        %s1423 = sld [smem:[#allocation3 + $0x39]]
        %v1424 = vstv %s1423
        %v1425 = vmul.f32 %v1424, %v1279
        %v1426 = vmul.f32 %v1424, %v1280
        %v1427 = vmul.f32 %v1424, %v1281
        %1431 = vrot.lane.b32.xlu0 %v1425, 127
        %v1432 = vpop.permute.xlu0 %1431
        %1433 = vrot.lane.b32.xlu0 %v1426, 127
        %v1434 = vpop.permute.xlu0 %1433
        %1435 = vrot.lane.b32.xlu0 %v1427, 127
        %v1436 = vpop.permute.xlu0 %1435
        %v1440 = vadd.f32 %v1368, %v1432
        %v1441 = vadd.f32 %v1369, %v1434
        %v1442 = vadd.f32 %v1370, %v1436
        %s1443 = sld [smem:[#allocation3 + $0x40]]
        %v1444 = vstv %s1443
        %v1445 = vmul.f32 %v1444, %v1279
        %v1446 = vmul.f32 %v1444, %v1280
        %v1447 = vmul.f32 %v1444, %v1281
        %1451 = vrot.lane.b32.xlu0 %v1445, 127
        %v1452 = vpop.permute.xlu0 %1451
        %1453 = vrot.lane.b32.xlu0 %v1446, 127
        %v1454 = vpop.permute.xlu0 %1453
        %1455 = vrot.lane.b32.xlu0 %v1447, 127
        %v1456 = vpop.permute.xlu0 %1455
        %v1460 = vadd.f32 %v1387, %v1452
        %v1461 = vadd.f32 %v1388, %v1454
        %v1462 = vadd.f32 %v1389, %v1456
        %s1463 = sld [smem:[#allocation3 + $0x47]]
        %v1464 = vstv %s1463
        %v1465 = vmul.f32 %v1464, %v1279
        %v1466 = vmul.f32 %v1464, %v1280
        %v1467 = vmul.f32 %v1464, %v1281
        %1471 = vrot.lane.b32.xlu0 %v1465, 127
        %v1472 = vpop.permute.xlu0 %1471
        %1473 = vrot.lane.b32.xlu0 %v1466, 127
        %v1474 = vpop.permute.xlu0 %1473
        %1475 = vrot.lane.b32.xlu0 %v1467, 127
        %v1476 = vpop.permute.xlu0 %1475
        %v1480 = vadd.f32 %v1406, %v1472
        %v1481 = vadd.f32 %v1407, %v1474
        %v1482 = vadd.f32 %v1408, %v1476
        %s1483 = sld [smem:[#allocation3 + $0x4e]]
        %v1484 = vstv %s1483
        %v1485 = vmul.f32 %v1484, %v1279
        %v1486 = vmul.f32 %v1484, %v1280
        %v1487 = vmul.f32 %v1484, %v1281
        %v1491 = vrot.slane %v1485, 4
        %v1492 = vrot.slane %v1486, 4
        %v1493 = vsel %vm261, %v1491, %v1492
        %v1494 = vrot.slane %v1487, 4
        %v1495 = vsel %vm261, %v1492, %v1494
        %1496 = vrot.lane.b32.xlu0 %v1493, 127
        %v1497 = vpop.permute.xlu0 %1496
        %1498 = vrot.lane.b32.xlu0 %v1495, 127
        %v1499 = vpop.permute.xlu0 %1498
        %v1502 = vadd.f32 %v1421, %v1497
        %v1503 = vadd.f32 %v1422, %v1499
        %s1504 = sld [smem:[#allocation3 + $0x55]]
        %v1505 = vstv %s1504
        %v1506 = vmul.f32 %v1505, %v1279
        %v1507 = vmul.f32 %v1505, %v1280
        %v1508 = vmul.f32 %v1505, %v1281
        %v1512 = vrot.slane %v1506, 4
        %v1513 = vrot.slane %v1507, 4
        %v1514 = vsel %vm261, %v1512, %v1513
        %v1515 = vrot.slane %v1508, 4
        %v1516 = vsel %vm261, %v1513, %v1515
        %1517 = vrot.lane.b32.xlu0 %v1514, 127
        %v1518 = vpop.permute.xlu0 %1517
        %1519 = vrot.lane.b32.xlu0 %v1516, 127
        %v1520 = vpop.permute.xlu0 %1519
        %1521 = vrot.lane.b32.xlu0 %v1515, 127
        %v1522 = vpop.permute.xlu0 %1521
        %v1526 = vadd.f32 %v1440, %v1518
        %v1527 = vadd.f32 %v1441, %v1520
        %v1528 = vadd.f32 %v1442, %v1522
        %s1529 = sld [smem:[#allocation3 + $0x5c]]
        %v1530 = vstv %s1529
        %v1531 = vmul.f32 %v1530, %v1279
        %v1532 = vmul.f32 %v1530, %v1280
        %v1533 = vmul.f32 %v1530, %v1281
        %v1537 = vrot.slane %v1531, 4
        %v1538 = vrot.slane %v1532, 4
        %v1539 = vsel %vm261, %v1537, %v1538
        %v1540 = vrot.slane %v1533, 4
        %v1541 = vsel %vm261, %v1538, %v1540
        %1542 = vrot.lane.b32.xlu0 %v1539, 127
        %v1543 = vpop.permute.xlu0 %1542
        %1544 = vrot.lane.b32.xlu0 %v1541, 127
        %v1545 = vpop.permute.xlu0 %1544
        %1546 = vrot.lane.b32.xlu0 %v1540, 127
        %v1547 = vpop.permute.xlu0 %1546
        %v1551 = vadd.f32 %v1460, %v1543
        %v1552 = vadd.f32 %v1461, %v1545
        %v1553 = vadd.f32 %v1462, %v1547
        %s1554 = sld [smem:[#allocation3 + $0x33]]
        %v1555 = vstv %s1554
        %v1556 = vmul.f32 %v1555, %v1279
        %v1557 = vmul.f32 %v1555, %v1280
        %v1560 = vrot.slane %v1556, 5
        %v1561 = vrot.slane %v1557, 5
        %v1562 = vsel %vm315, %v1560, %v1561
        %1563 = vrot.lane.b32.xlu0 %v1560, 126
        %v1564 = vpop.permute.xlu0 %1563
        %1565 = vrot.lane.b32.xlu0 %v1562, 126
        %v1566 = vpop.permute.xlu0 %1565
        %1567 = vrot.lane.b32.xlu0 %v1561, 126
        %v1568 = vpop.permute.xlu0 %1567
        %v1572 = vadd.f32 %v1480, %v1564
        %v1573 = vadd.f32 %v1481, %v1566
        %v1574 = vadd.f32 %v1482, %v1568
        %s1575 = sld [smem:[#allocation3 + $0x3a]]
        %v1576 = vstv %s1575
        %v1577 = vmul.f32 %v1576, %v1279
        %v1578 = vmul.f32 %v1576, %v1280
        %v1579 = vmul.f32 %v1576, %v1281
        %v1583 = vrot.slane %v1577, 1
        %v1584 = vrot.slane %v1578, 1
        %v1585 = vsel %vm339, %v1583, %v1584
        %v1586 = vrot.slane %v1579, 1
        %v1587 = vsel %vm339, %v1584, %v1586
        %1588 = vrot.lane.b32.xlu0 %v1585, 126
        %v1589 = vpop.permute.xlu0 %1588
        %1590 = vrot.lane.b32.xlu0 %v1587, 126
        %v1591 = vpop.permute.xlu0 %1590
        %v1594 = vadd.f32 %v1502, %v1589
        %v1595 = vadd.f32 %v1503, %v1591
        %s1596 = sld [smem:[#allocation3 + $0x41]]
        %v1597 = vstv %s1596
        %v1598 = vmul.f32 %v1597, %v1279
        %v1599 = vmul.f32 %v1597, %v1280
        %v1600 = vmul.f32 %v1597, %v1281
        %v1604 = vrot.slane %v1598, 1
        %v1605 = vrot.slane %v1599, 1
        %v1606 = vsel %vm339, %v1604, %v1605
        %v1607 = vrot.slane %v1600, 1
        %v1608 = vsel %vm339, %v1605, %v1607
        %1609 = vrot.lane.b32.xlu0 %v1606, 126
        %v1610 = vpop.permute.xlu0 %1609
        %1611 = vrot.lane.b32.xlu0 %v1608, 126
        %v1612 = vpop.permute.xlu0 %1611
        %1613 = vrot.lane.b32.xlu0 %v1607, 126
        %v1614 = vpop.permute.xlu0 %1613
        %v1618 = vadd.f32 %v1526, %v1610
        %v1619 = vadd.f32 %v1527, %v1612
        %v1620 = vadd.f32 %v1528, %v1614
        %s1621 = sld [smem:[#allocation3 + $0x48]]
        %v1622 = vstv %s1621
        %v1623 = vmul.f32 %v1622, %v1279
        %v1624 = vmul.f32 %v1622, %v1280
        %v1625 = vmul.f32 %v1622, %v1281
        %v1629 = vrot.slane %v1623, 1
        %v1630 = vrot.slane %v1624, 1
        %v1631 = vsel %vm339, %v1629, %v1630
        %v1632 = vrot.slane %v1625, 1
        %v1633 = vsel %vm339, %v1630, %v1632
        %1634 = vrot.lane.b32.xlu0 %v1631, 126
        %v1635 = vpop.permute.xlu0 %1634
        %1636 = vrot.lane.b32.xlu0 %v1633, 126
        %v1637 = vpop.permute.xlu0 %1636
        %1638 = vrot.lane.b32.xlu0 %v1632, 126
        %v1639 = vpop.permute.xlu0 %1638
        %v1643 = vadd.f32 %v1551, %v1635
        %v1644 = vadd.f32 %v1552, %v1637
        %v1645 = vadd.f32 %v1553, %v1639
        %s1646 = sld [smem:[#allocation3 + $0x4f]]
        %v1647 = vstv %s1646
        %v1648 = vmul.f32 %v1647, %v1279
        %v1649 = vmul.f32 %v1647, %v1280
        %v1650 = vmul.f32 %v1647, %v1281
        %v1654 = vrot.slane %v1648, 1
        %v1655 = vrot.slane %v1649, 1
        %v1656 = vsel %vm339, %v1654, %v1655
        %v1657 = vrot.slane %v1650, 1
        %v1658 = vsel %vm339, %v1655, %v1657
        %1659 = vrot.lane.b32.xlu0 %v1656, 126
        %v1660 = vpop.permute.xlu0 %1659
        %1661 = vrot.lane.b32.xlu0 %v1658, 126
        %v1662 = vpop.permute.xlu0 %1661
        %1663 = vrot.lane.b32.xlu0 %v1657, 126
        %v1664 = vpop.permute.xlu0 %1663
        %v1668 = vadd.f32 %v1572, %v1660
        %v1669 = vadd.f32 %v1573, %v1662
        %v1670 = vadd.f32 %v1574, %v1664
        %s1671 = sld [smem:[#allocation3 + $0x56]]
        %v1672 = vstv %s1671
        %v1673 = vmul.f32 %v1672, %v1279
        %v1674 = vmul.f32 %v1672, %v1280
        %v1675 = vmul.f32 %v1672, %v1281
        %v1679 = vrot.slane %v1673, 5
        %v1680 = vrot.slane %v1674, 5
        %v1681 = vsel %vm315, %v1679, %v1680
        %v1682 = vrot.slane %v1675, 5
        %v1683 = vsel %vm315, %v1680, %v1682
        %1684 = vrot.lane.b32.xlu0 %v1681, 126
        %v1685 = vpop.permute.xlu0 %1684
        %1686 = vrot.lane.b32.xlu0 %v1683, 126
        %v1687 = vpop.permute.xlu0 %1686
        %v1690 = vadd.f32 %v1594, %v1685
        %v1691 = vadd.f32 %v1595, %v1687
        %s1692 = sld [smem:[#allocation3 + $0x5d]]
        %v1693 = vstv %s1692
        %v1694 = vmul.f32 %v1693, %v1279
        %v1695 = vmul.f32 %v1693, %v1280
        %v1696 = vmul.f32 %v1693, %v1281
        %v1700 = vrot.slane %v1694, 5
        %v1701 = vrot.slane %v1695, 5
        %v1702 = vsel %vm315, %v1700, %v1701
        %v1703 = vrot.slane %v1696, 5
        %v1704 = vsel %vm315, %v1701, %v1703
        %1705 = vrot.lane.b32.xlu0 %v1702, 126
        %v1706 = vpop.permute.xlu0 %1705
        %1707 = vrot.lane.b32.xlu0 %v1704, 126
        %v1708 = vpop.permute.xlu0 %1707
        %1709 = vrot.lane.b32.xlu0 %v1703, 126
        %v1710 = vpop.permute.xlu0 %1709
        %v1714 = vadd.f32 %v1618, %v1706
        %v1715 = vadd.f32 %v1619, %v1708
        %v1716 = vadd.f32 %v1620, %v1710
        %s1717 = sld [smem:[#allocation3 + $0x34]]
        %v1718 = vstv %s1717
        %v1719 = vmul.f32 %v1718, %v1279
        %v1720 = vmul.f32 %v1718, %v1280
        %v1723 = vrot.slane %v1719, 6
        %v1724 = vrot.slane %v1720, 6
        %v1725 = vsel %vm480, %v1723, %v1724
        %1726 = vrot.lane.b32.xlu0 %v1723, 125
        %v1727 = vpop.permute.xlu0 %1726
        %1728 = vrot.lane.b32.xlu0 %v1725, 125
        %v1729 = vpop.permute.xlu0 %1728
        %1730 = vrot.lane.b32.xlu0 %v1724, 125
        %v1731 = vpop.permute.xlu0 %1730
        %v1735 = vadd.f32 %v1643, %v1727
        %v1736 = vadd.f32 %v1644, %v1729
        %v1737 = vadd.f32 %v1645, %v1731
        %s1738 = sld [smem:[#allocation3 + $0x3b]]
        %v1739 = vstv %s1738
        %v1740 = vmul.f32 %v1739, %v1279
        %v1741 = vmul.f32 %v1739, %v1280
        %v1742 = vmul.f32 %v1739, %v1281
        %v1746 = vrot.slane %v1740, 6
        %v1747 = vrot.slane %v1741, 6
        %v1748 = vsel %vm480, %v1746, %v1747
        %v1749 = vrot.slane %v1742, 6
        %v1750 = vsel %vm480, %v1747, %v1749
        %1751 = vrot.lane.b32.xlu0 %v1746, 125
        %v1752 = vpop.permute.xlu0 %1751
        %1753 = vrot.lane.b32.xlu0 %v1748, 125
        %v1754 = vpop.permute.xlu0 %1753
        %1755 = vrot.lane.b32.xlu0 %v1750, 125
        %v1756 = vpop.permute.xlu0 %1755
        %v1760 = vadd.f32 %v1668, %v1752
        %v1761 = vadd.f32 %v1669, %v1754
        %v1762 = vadd.f32 %v1670, %v1756
        %s1763 = sld [smem:[#allocation3 + $0x42]]
        %v1764 = vstv %s1763
        %v1765 = vmul.f32 %v1764, %v1279
        %v1766 = vmul.f32 %v1764, %v1280
        %v1767 = vmul.f32 %v1764, %v1281
        %v1771 = vrot.slane %v1765, 2
        %v1772 = vrot.slane %v1766, 2
        %v1773 = vsel %vm529, %v1771, %v1772
        %v1774 = vrot.slane %v1767, 2
        %v1775 = vsel %vm529, %v1772, %v1774
        %1776 = vrot.lane.b32.xlu0 %v1773, 125
        %v1777 = vpop.permute.xlu0 %1776
        %1778 = vrot.lane.b32.xlu0 %v1775, 125
        %v1779 = vpop.permute.xlu0 %1778
        %v1782 = vadd.f32 %v1690, %v1777
        %v1783 = vadd.f32 %v1691, %v1779
        %s1784 = sld [smem:[#allocation3 + $0x49]]
        %v1785 = vstv %s1784
        %v1786 = vmul.f32 %v1785, %v1279
        %v1787 = vmul.f32 %v1785, %v1280
        %v1788 = vmul.f32 %v1785, %v1281
        %v1792 = vrot.slane %v1786, 2
        %v1793 = vrot.slane %v1787, 2
        %v1794 = vsel %vm529, %v1792, %v1793
        %v1795 = vrot.slane %v1788, 2
        %v1796 = vsel %vm529, %v1793, %v1795
        %1797 = vrot.lane.b32.xlu0 %v1794, 125
        %v1798 = vpop.permute.xlu0 %1797
        %1799 = vrot.lane.b32.xlu0 %v1796, 125
        %v1800 = vpop.permute.xlu0 %1799
        %1801 = vrot.lane.b32.xlu0 %v1795, 125
        %v1802 = vpop.permute.xlu0 %1801
        %v1806 = vadd.f32 %v1714, %v1798
        %v1807 = vadd.f32 %v1715, %v1800
        %v1808 = vadd.f32 %v1716, %v1802
        %s1809 = sld [smem:[#allocation3 + $0x50]]
        %v1810 = vstv %s1809
        %v1811 = vmul.f32 %v1810, %v1279
        %v1812 = vmul.f32 %v1810, %v1280
        %v1813 = vmul.f32 %v1810, %v1281
        %v1817 = vrot.slane %v1811, 2
        %v1818 = vrot.slane %v1812, 2
        %v1819 = vsel %vm529, %v1817, %v1818
        %v1820 = vrot.slane %v1813, 2
        %v1821 = vsel %vm529, %v1818, %v1820
        %1822 = vrot.lane.b32.xlu0 %v1819, 125
        %v1823 = vpop.permute.xlu0 %1822
        %1824 = vrot.lane.b32.xlu0 %v1821, 125
        %v1825 = vpop.permute.xlu0 %1824
        %1826 = vrot.lane.b32.xlu0 %v1820, 125
        %v1827 = vpop.permute.xlu0 %1826
        %v1831 = vadd.f32 %v1735, %v1823
        %v1832 = vadd.f32 %v1736, %v1825
        %v1833 = vadd.f32 %v1737, %v1827
        %s1834 = sld [smem:[#allocation3 + $0x57]]
        %v1835 = vstv %s1834
        %v1836 = vmul.f32 %v1835, %v1279
        %v1837 = vmul.f32 %v1835, %v1280
        %v1838 = vmul.f32 %v1835, %v1281
        %v1842 = vrot.slane %v1836, 2
        %v1843 = vrot.slane %v1837, 2
        %v1844 = vsel %vm529, %v1842, %v1843
        %v1845 = vrot.slane %v1838, 2
        %v1846 = vsel %vm529, %v1843, %v1845
        %1847 = vrot.lane.b32.xlu0 %v1844, 125
        %v1848 = vpop.permute.xlu0 %1847
        %1849 = vrot.lane.b32.xlu0 %v1846, 125
        %v1850 = vpop.permute.xlu0 %1849
        %1851 = vrot.lane.b32.xlu0 %v1845, 125
        %v1852 = vpop.permute.xlu0 %1851
        %v1856 = vadd.f32 %v1760, %v1848
        %v1857 = vadd.f32 %v1761, %v1850
        %v1858 = vadd.f32 %v1762, %v1852
        %s1859 = sld [smem:[#allocation3 + $0x5e]]
        %v1860 = vstv %s1859
        %v1861 = vmul.f32 %v1860, %v1279
        %v1862 = vmul.f32 %v1860, %v1280
        %v1863 = vmul.f32 %v1860, %v1281
        %v1867 = vrot.slane %v1861, 6
        %v1868 = vrot.slane %v1862, 6
        %v1869 = vsel %vm480, %v1867, %v1868
        %v1870 = vrot.slane %v1863, 6
        %v1871 = vsel %vm480, %v1868, %v1870
        %1872 = vrot.lane.b32.xlu0 %v1869, 125
        %v1873 = vpop.permute.xlu0 %1872
        %1874 = vrot.lane.b32.xlu0 %v1871, 125
        %v1875 = vpop.permute.xlu0 %1874
        %v1878 = vadd.f32 %v1782, %v1873
        %v1879 = vadd.f32 %v1783, %v1875
        %s1880 = sld [smem:[#allocation3 + $0x35]]
        %v1881 = vstv %s1880
        %v1882 = vmul.f32 %v1881, %v1279
        %v1883 = vmul.f32 %v1881, %v1280
        %v1886 = vrot.slane %v1882, 7
        %v1887 = vrot.slane %v1883, 7
        %v1888 = vsel %vm645, %v1886, %v1887
        %1889 = vrot.lane.b32.xlu0 %v1886, 124
        %v1890 = vpop.permute.xlu0 %1889
        %1891 = vrot.lane.b32.xlu0 %v1888, 124
        %v1892 = vpop.permute.xlu0 %1891
        %1893 = vrot.lane.b32.xlu0 %v1887, 124
        %v1894 = vpop.permute.xlu0 %1893
        %v1898 = vadd.f32 %v1806, %v1890
        %v1899 = vadd.f32 %v1807, %v1892
        %v1900 = vadd.f32 %v1808, %v1894
        %s1901 = sld [smem:[#allocation3 + $0x3c]]
        %v1902 = vstv %s1901
        %v1903 = vmul.f32 %v1902, %v1279
        %v1904 = vmul.f32 %v1902, %v1280
        %v1905 = vmul.f32 %v1902, %v1281
        %v1909 = vrot.slane %v1903, 7
        %v1910 = vrot.slane %v1904, 7
        %v1911 = vsel %vm645, %v1909, %v1910
        %v1912 = vrot.slane %v1905, 7
        %v1913 = vsel %vm645, %v1910, %v1912
        %1914 = vrot.lane.b32.xlu0 %v1909, 124
        %v1915 = vpop.permute.xlu0 %1914
        %1916 = vrot.lane.b32.xlu0 %v1911, 124
        %v1917 = vpop.permute.xlu0 %1916
        %1918 = vrot.lane.b32.xlu0 %v1913, 124
        %v1919 = vpop.permute.xlu0 %1918
        %v1923 = vadd.f32 %v1831, %v1915
        %v1924 = vadd.f32 %v1832, %v1917
        %v1925 = vadd.f32 %v1833, %v1919
        %s1926 = sld [smem:[#allocation3 + $0x43]]
        %v1927 = vstv %s1926
        %v1928 = vmul.f32 %v1927, %v1279
        %v1929 = vmul.f32 %v1927, %v1280
        %v1930 = vmul.f32 %v1927, %v1281
        %v1934 = vrot.slane %v1928, 7
        %v1935 = vrot.slane %v1929, 7
        %v1936 = vsel %vm645, %v1934, %v1935
        %v1937 = vrot.slane %v1930, 7
        %v1938 = vsel %vm645, %v1935, %v1937
        %1939 = vrot.lane.b32.xlu0 %v1934, 124
        %v1940 = vpop.permute.xlu0 %1939
        %1941 = vrot.lane.b32.xlu0 %v1936, 124
        %v1942 = vpop.permute.xlu0 %1941
        %1943 = vrot.lane.b32.xlu0 %v1938, 124
        %v1944 = vpop.permute.xlu0 %1943
        %v1948 = vadd.f32 %v1856, %v1940
        %v1949 = vadd.f32 %v1857, %v1942
        %v1950 = vadd.f32 %v1858, %v1944
        %s1951 = sld [smem:[#allocation3 + $0x4a]]
        %v1952 = vstv %s1951
        %v1953 = vmul.f32 %v1952, %v1279
        %v1954 = vmul.f32 %v1952, %v1280
        %v1955 = vmul.f32 %v1952, %v1281
        %v1959 = vrot.slane %v1953, 3
        %v1960 = vrot.slane %v1954, 3
        %v1961 = vsel %vm719, %v1959, %v1960
        %v1962 = vrot.slane %v1955, 3
        %v1963 = vsel %vm719, %v1960, %v1962
        %1964 = vrot.lane.b32.xlu0 %v1961, 124
        %v1965 = vpop.permute.xlu0 %1964
        %1966 = vrot.lane.b32.xlu0 %v1963, 124
        %v1967 = vpop.permute.xlu0 %1966
        %v1970 = vadd.f32 %v1878, %v1965
        %v1971 = vadd.f32 %v1879, %v1967
        %s1972 = sld [smem:[#allocation3 + $0x51]]
        %v1973 = vstv %s1972
        %v1974 = vmul.f32 %v1973, %v1279
        %v1975 = vmul.f32 %v1973, %v1280
        %v1976 = vmul.f32 %v1973, %v1281
        %v1980 = vrot.slane %v1974, 3
        %v1981 = vrot.slane %v1975, 3
        %v1982 = vsel %vm719, %v1980, %v1981
        %v1983 = vrot.slane %v1976, 3
        %v1984 = vsel %vm719, %v1981, %v1983
        %1985 = vrot.lane.b32.xlu0 %v1982, 124
        %v1986 = vpop.permute.xlu0 %1985
        %1987 = vrot.lane.b32.xlu0 %v1984, 124
        %v1988 = vpop.permute.xlu0 %1987
        %1989 = vrot.lane.b32.xlu0 %v1983, 124
        %v1990 = vpop.permute.xlu0 %1989
        %v1994 = vadd.f32 %v1898, %v1986
        %v1995 = vadd.f32 %v1899, %v1988
        %v1996 = vadd.f32 %v1900, %v1990
        %s1997 = sld [smem:[#allocation3 + $0x58]]
        %v1998 = vstv %s1997
        %v1999 = vmul.f32 %v1998, %v1279
        %v2000 = vmul.f32 %v1998, %v1280
        %v2001 = vmul.f32 %v1998, %v1281
        %v2005 = vrot.slane %v1999, 3
        %v2006 = vrot.slane %v2000, 3
        %v2007 = vsel %vm719, %v2005, %v2006
        %v2008 = vrot.slane %v2001, 3
        %v2009 = vsel %vm719, %v2006, %v2008
        %2010 = vrot.lane.b32.xlu0 %v2007, 124
        %v2011 = vpop.permute.xlu0 %2010
        %2012 = vrot.lane.b32.xlu0 %v2009, 124
        %v2013 = vpop.permute.xlu0 %2012
        %2014 = vrot.lane.b32.xlu0 %v2008, 124
        %v2015 = vpop.permute.xlu0 %2014
        %v2019 = vadd.f32 %v1923, %v2011
        %v2020 = vadd.f32 %v1924, %v2013
        %v2021 = vadd.f32 %v1925, %v2015
        %s2022 = sld [smem:[#allocation3 + $0x5f]]
        %v2023 = vstv %s2022
        %v2024 = vmul.f32 %v2023, %v1279
        %v2025 = vmul.f32 %v2023, %v1280
        %v2026 = vmul.f32 %v2023, %v1281
        %v2030 = vrot.slane %v2024, 3
        %v2031 = vrot.slane %v2025, 3
        %v2032 = vsel %vm719, %v2030, %v2031
        %v2033 = vrot.slane %v2026, 3
        %v2034 = vsel %vm719, %v2031, %v2033
        %2035 = vrot.lane.b32.xlu0 %v2032, 124
        %v2036 = vpop.permute.xlu0 %2035
        %2037 = vrot.lane.b32.xlu0 %v2034, 124
        %v2038 = vpop.permute.xlu0 %2037
        %2039 = vrot.lane.b32.xlu0 %v2033, 124
        %v2040 = vpop.permute.xlu0 %2039
        %v2044 = vadd.f32 %v1948, %v2036
        %v2045 = vadd.f32 %v1949, %v2038
        %v2046 = vadd.f32 %v1950, %v2040
        %s2047 = sld [smem:[#allocation3 + $0x36]]
        %v2048 = vstv %s2047
        %v2049 = vmul.f32 %v2048, %v1279
        %v2050 = vmul.f32 %v2048, %v1280
        %2053 = vrot.lane.b32.xlu0 %v2049, 123
        %v2054 = vpop.permute.xlu0 %2053
        %2055 = vrot.lane.b32.xlu0 %v2050, 123
        %v2056 = vpop.permute.xlu0 %2055
        %v2059 = vadd.f32 %v1970, %v2054
        %v2060 = vadd.f32 %v1971, %v2056
        %s2061 = sld [smem:[#allocation3 + $0x3d]]
        %v2062 = vstv %s2061
        %v2063 = vmul.f32 %v2062, %v1279
        %v2064 = vmul.f32 %v2062, %v1280
        %v2065 = vmul.f32 %v2062, %v1281
        %2069 = vrot.lane.b32.xlu0 %v2063, 123
        %v2070 = vpop.permute.xlu0 %2069
        %2071 = vrot.lane.b32.xlu0 %v2064, 123
        %v2072 = vpop.permute.xlu0 %2071
        %2073 = vrot.lane.b32.xlu0 %v2065, 123
        %v2074 = vpop.permute.xlu0 %2073
        %v2078 = vadd.f32 %v1994, %v2070
        %v2079 = vadd.f32 %v1995, %v2072
        %v2080 = vadd.f32 %v1996, %v2074
        %s2081 = sld [smem:[#allocation3 + $0x44]]
        %v2082 = vstv %s2081
        %v2083 = vmul.f32 %v2082, %v1279
        %v2084 = vmul.f32 %v2082, %v1280
        %v2085 = vmul.f32 %v2082, %v1281
        %2089 = vrot.lane.b32.xlu0 %v2083, 123
        %v2090 = vpop.permute.xlu0 %2089
        %2091 = vrot.lane.b32.xlu0 %v2084, 123
        %v2092 = vpop.permute.xlu0 %2091
        %2093 = vrot.lane.b32.xlu0 %v2085, 123
        %v2094 = vpop.permute.xlu0 %2093
        %v2098 = vadd.f32 %v2019, %v2090
        %v2099 = vadd.f32 %v2020, %v2092
        %v2100 = vadd.f32 %v2021, %v2094
        %s2101 = sld [smem:[#allocation3 + $0x4b]]
        %v2102 = vstv %s2101
        %v2103 = vmul.f32 %v2102, %v1279
        %v2104 = vmul.f32 %v2102, %v1280
        %v2105 = vmul.f32 %v2102, %v1281
        %2109 = vrot.lane.b32.xlu0 %v2103, 123
        %v2110 = vpop.permute.xlu0 %2109
        %2111 = vrot.lane.b32.xlu0 %v2104, 123
        %v2112 = vpop.permute.xlu0 %2111
        %2113 = vrot.lane.b32.xlu0 %v2105, 123
        %v2114 = vpop.permute.xlu0 %2113
        %v2118 = vadd.f32 %v2044, %v2110
        %v2119 = vadd.f32 %v2045, %v2112
        %v2120 = vadd.f32 %v2046, %v2114
        %s2121 = sld [smem:[#allocation3 + $0x52]]
        %v2122 = vstv %s2121
        %v2123 = vmul.f32 %v2122, %v1279
        %v2124 = vmul.f32 %v2122, %v1280
        %v2125 = vmul.f32 %v2122, %v1281
        %v2129 = vrot.slane %v2123, 4
        %v2130 = vrot.slane %v2124, 4
        %v2131 = vsel %vm261, %v2129, %v2130
        %v2132 = vrot.slane %v2125, 4
        %v2133 = vsel %vm261, %v2130, %v2132
        %2134 = vrot.lane.b32.xlu0 %v2131, 123
        %v2135 = vpop.permute.xlu0 %2134
        %2136 = vrot.lane.b32.xlu0 %v2133, 123
        %v2137 = vpop.permute.xlu0 %2136
        %v2140 = vadd.f32 %v2059, %v2135
        %v2141 = vadd.f32 %v2060, %v2137
        %s2142 = sld [smem:[#allocation3 + $0x59]]
        %v2143 = vstv %s2142
        %v2144 = vmul.f32 %v2143, %v1279
        %v2145 = vmul.f32 %v2143, %v1280
        %v2146 = vmul.f32 %v2143, %v1281
        %v2150 = vrot.slane %v2144, 4
        %v2151 = vrot.slane %v2145, 4
        %v2152 = vsel %vm261, %v2150, %v2151
        %v2153 = vrot.slane %v2146, 4
        %v2154 = vsel %vm261, %v2151, %v2153
        %2155 = vrot.lane.b32.xlu0 %v2152, 123
        %v2156 = vpop.permute.xlu0 %2155
        %2157 = vrot.lane.b32.xlu0 %v2154, 123
        %v2158 = vpop.permute.xlu0 %2157
        %2159 = vrot.lane.b32.xlu0 %v2153, 123
        %v2160 = vpop.permute.xlu0 %2159
        %v2164 = vadd.f32 %v2078, %v2156
        %v2165 = vadd.f32 %v2079, %v2158
        %v2166 = vadd.f32 %v2080, %v2160
        %s2167 = sld [smem:[#allocation3 + $0x60]]
        %v2168 = vstv %s2167
        %v2169 = vmul.f32 %v2168, %v1279
        %v2170 = vmul.f32 %v2168, %v1280
        %v2171 = vmul.f32 %v2168, %v1281
        %v2175 = vrot.slane %v2169, 4
        %v2176 = vrot.slane %v2170, 4
        %v2177 = vsel %vm261, %v2175, %v2176
        %v2178 = vrot.slane %v2171, 4
        %v2179 = vsel %vm261, %v2176, %v2178
        %2180 = vrot.lane.b32.xlu0 %v2177, 123
        %v2181 = vpop.permute.xlu0 %2180
        %2182 = vrot.lane.b32.xlu0 %v2179, 123
        %v2183 = vpop.permute.xlu0 %2182
        %2184 = vrot.lane.b32.xlu0 %v2178, 123
        %v2185 = vpop.permute.xlu0 %2184
        %v2189 = vadd.f32 %v2098, %v2181
        %v2190 = vadd.f32 %v2099, %v2183
        %v2191 = vadd.f32 %v2100, %v2185
        %s2192 = sld [smem:[#allocation3 + $0x37]]
        %v2193 = vstv %s2192
        %v2194 = vmul.f32 %v2193, %v1279
        %v2195 = vmul.f32 %v2193, %v1280
        %v2198 = vrot.slane %v2194, 5
        %v2199 = vrot.slane %v2195, 5
        %v2200 = vsel %vm315, %v2198, %v2199
        %2201 = vrot.lane.b32.xlu0 %v2198, 122
        %v2202 = vpop.permute.xlu0 %2201
        %2203 = vrot.lane.b32.xlu0 %v2200, 122
        %v2204 = vpop.permute.xlu0 %2203
        %2205 = vrot.lane.b32.xlu0 %v2199, 122
        %v2206 = vpop.permute.xlu0 %2205
        %v2210 = vadd.f32 %v2118, %v2202
        %v2211 = vadd.f32 %v2119, %v2204
        %v2212 = vadd.f32 %v2120, %v2206
        %s2213 = sld [smem:[#allocation3 + $0x3e]]
        %v2214 = vstv %s2213
        %v2215 = vmul.f32 %v2214, %v1279
        %v2216 = vmul.f32 %v2214, %v1280
        %v2217 = vmul.f32 %v2214, %v1281
        %v2221 = vrot.slane %v2215, 1
        %v2222 = vrot.slane %v2216, 1
        %v2223 = vsel %vm339, %v2221, %v2222
        %v2224 = vrot.slane %v2217, 1
        %v2225 = vsel %vm339, %v2222, %v2224
        %2226 = vrot.lane.b32.xlu0 %v2223, 122
        %v2227 = vpop.permute.xlu0 %2226
        %2228 = vrot.lane.b32.xlu0 %v2225, 122
        %v2229 = vpop.permute.xlu0 %2228
        %v2232 = vadd.f32 %v2140, %v2227
        %v2233 = vadd.f32 %v2141, %v2229
        %s2234 = sld [smem:[#allocation3 + $0x45]]
        %v2235 = vstv %s2234
        %v2236 = vmul.f32 %v2235, %v1279
        %v2237 = vmul.f32 %v2235, %v1280
        %v2238 = vmul.f32 %v2235, %v1281
        %v2242 = vrot.slane %v2236, 1
        %v2243 = vrot.slane %v2237, 1
        %v2244 = vsel %vm339, %v2242, %v2243
        %v2245 = vrot.slane %v2238, 1
        %v2246 = vsel %vm339, %v2243, %v2245
        %2247 = vrot.lane.b32.xlu0 %v2244, 122
        %v2248 = vpop.permute.xlu0 %2247
        %2249 = vrot.lane.b32.xlu0 %v2246, 122
        %v2250 = vpop.permute.xlu0 %2249
        %2251 = vrot.lane.b32.xlu0 %v2245, 122
        %v2252 = vpop.permute.xlu0 %2251
        %v2256 = vadd.f32 %v2164, %v2248
        %v2257 = vadd.f32 %v2165, %v2250
        %v2258 = vadd.f32 %v2166, %v2252
        %s2259 = sld [smem:[#allocation3 + $0x4c]]
        %v2260 = vstv %s2259
        %v2261 = vmul.f32 %v2260, %v1279
        %v2262 = vmul.f32 %v2260, %v1280
        %v2263 = vmul.f32 %v2260, %v1281
        %v2267 = vrot.slane %v2261, 1
        %v2268 = vrot.slane %v2262, 1
        %v2269 = vsel %vm339, %v2267, %v2268
        %v2270 = vrot.slane %v2263, 1
        %v2271 = vsel %vm339, %v2268, %v2270
        %2272 = vrot.lane.b32.xlu0 %v2269, 122
        %v2273 = vpop.permute.xlu0 %2272
        %2274 = vrot.lane.b32.xlu0 %v2271, 122
        %v2275 = vpop.permute.xlu0 %2274
        %2276 = vrot.lane.b32.xlu0 %v2270, 122
        %v2277 = vpop.permute.xlu0 %2276
        %v2281 = vadd.f32 %v2189, %v2273
        %v2282 = vadd.f32 %v2190, %v2275
        %v2283 = vadd.f32 %v2191, %v2277
        %s2284 = sld [smem:[#allocation3 + $0x53]]
        %v2285 = vstv %s2284
        %v2286 = vmul.f32 %v2285, %v1279
        %v2287 = vmul.f32 %v2285, %v1280
        %v2288 = vmul.f32 %v2285, %v1281
        %v2292 = vrot.slane %v2286, 1
        %v2293 = vrot.slane %v2287, 1
        %v2294 = vsel %vm339, %v2292, %v2293
        %v2295 = vrot.slane %v2288, 1
        %v2296 = vsel %vm339, %v2293, %v2295
        %2297 = vrot.lane.b32.xlu0 %v2294, 122
        %v2298 = vpop.permute.xlu0 %2297
        %2299 = vrot.lane.b32.xlu0 %v2296, 122
        %v2300 = vpop.permute.xlu0 %2299
        %2301 = vrot.lane.b32.xlu0 %v2295, 122
        %v2302 = vpop.permute.xlu0 %2301
        %v2306 = vadd.f32 %v2210, %v2298
        %v2307 = vadd.f32 %v2211, %v2300
        %v2308 = vadd.f32 %v2212, %v2302
        %s2309 = sld [smem:[#allocation3 + $0x5a]]
        %v2310 = vstv %s2309
        %v2311 = vmul.f32 %v2310, %v1279
        %v2312 = vmul.f32 %v2310, %v1280
        %v2313 = vmul.f32 %v2310, %v1281
        %v2317 = vrot.slane %v2311, 5
        %v2318 = vrot.slane %v2312, 5
        %v2319 = vsel %vm315, %v2317, %v2318
        %v2320 = vrot.slane %v2313, 5
        %v2321 = vsel %vm315, %v2318, %v2320
        %2322 = vrot.lane.b32.xlu0 %v2319, 122
        %v2323 = vpop.permute.xlu0 %2322
        %2324 = vrot.lane.b32.xlu0 %v2321, 122
        %v2325 = vpop.permute.xlu0 %2324
        %v2328 = vadd.f32 %v2232, %v2323
        %v2329 = vadd.f32 %v2233, %v2325
        %s2330 = sld [smem:[#allocation3 + $0x61]]
        %v2331 = vstv %s2330
        %v2332 = vmul.f32 %v2331, %v1279
        %v2333 = vmul.f32 %v2331, %v1280
        %v2334 = vmul.f32 %v2331, %v1281
        %v2338 = vrot.slane %v2332, 5
        %v2339 = vrot.slane %v2333, 5
        %v2340 = vsel %vm315, %v2338, %v2339
        %v2341 = vrot.slane %v2334, 5
        %v2342 = vsel %vm315, %v2339, %v2341
        %2343 = vrot.lane.b32.xlu0 %v2340, 122
        %v2344 = vpop.permute.xlu0 %2343
        %2345 = vrot.lane.b32.xlu0 %v2342, 122
        %v2346 = vpop.permute.xlu0 %2345
        %2347 = vrot.lane.b32.xlu0 %v2341, 122
        %v2348 = vpop.permute.xlu0 %2347
        %v2352 = vadd.f32 %v2256, %v2344
        %v2353 = vadd.f32 %v2257, %v2346
        %v2354 = vadd.f32 %v2258, %v2348
        %v2358 = vrot.slane %v2352, 1
        %v2359 = vrot.slane %v2353, 1
        %v2360 = vsel %vm339, %v2358, %v2359
        %v2361 = vrot.slane %v2354, 1
        %v2362 = vsel %vm339, %v2359, %v2361
        %v2365 = vadd.f32 %v2328, %v2360
        %v2366 = vadd.f32 %v2329, %v2362
        %v2370 = vrot.slane %v2306, 1
        %v2371 = vrot.slane %v2307, 1
        %v2372 = vsel %vm339, %v2370, %v2371
        %v2373 = vrot.slane %v2308, 1
        %v2374 = vsel %vm339, %v2371, %v2373
        %v2378 = vadd.f32 %v2281, %v2372
        %v2379 = vadd.f32 %v2282, %v2374
        %v2380 = vadd.f32 %v2283, %v2373
        %v2384 = vrot.slane %v2378, 2
        %v2385 = vrot.slane %v2379, 2
        %v2386 = vsel %vm529, %v2384, %v2385
        %v2387 = vrot.slane %v2380, 2
        %v2388 = vsel %vm529, %v2385, %v2387
        %v2391 = vadd.f32 %v2365, %v2386
        %v2392 = vadd.f32 %v2366, %v2388
        %v2393 = vxor.u32 %v2391, 2147483648
        %v2394 = vxor.u32 %v2392, 2147483648
        %v2395 = vmul.f32 %v2393, 1.442695
        %v2396 = vpow.pop %v2395
        %v2397 = vmul.f32 %v2394, 1.442695
        %v2398 = vpow.pop %v2397
        %v2399 = vadd.f32 %v2396, 1.0
        %v2400 = vadd.f32 %v2398, 1.0
        %v2401 = vrcp.pop %v2399
        %v2402 = vmul.f32 %v2399, %v2401
        %v2403 = vsub.f32 1.0, %v2402
        %v2404 = vmul.f32 %v2401, %v2403
        %v2405 = vadd.f32 %v2401, %v2404
        %vm2406 = vweird.f32 %v2399
        %vm2407 = vweird.f32 %v2401
        %vm2408 = vmor %vm2406, %vm2407
        %v2409 = vsel %vm2408, %v2401, %v2405
        %v2410 = vand.u32 2147483647, %v2399
        %vm2411 = vcmp.eq.f32.partialorder %v2410, 8.507059e+37
        %v2412 = vand.u32 %v2399, 2147483648
        %v2413 = vor.u32 1.1754944e-38, %v2412
        %v2414 = vsel %vm2411, %v2413, %v2409
        %v2415 = vmul.f32 1.0, %v2414
        %v2416 = vrcp.pop %v2400
        %v2417 = vmul.f32 %v2400, %v2416
        %v2418 = vsub.f32 1.0, %v2417
        %v2419 = vmul.f32 %v2416, %v2418
        %v2420 = vadd.f32 %v2416, %v2419
        %vm2421 = vweird.f32 %v2400
        %vm2422 = vweird.f32 %v2416
        %vm2423 = vmor %vm2421, %vm2422
        %v2424 = vsel %vm2423, %v2416, %v2420
        %v2425 = vand.u32 2147483647, %v2400
        %vm2426 = vcmp.eq.f32.partialorder %v2425, 8.507059e+37
        %v2427 = vand.u32 %v2400, 2147483648
        %v2428 = vor.u32 1.1754944e-38, %v2427
        %v2429 = vsel %vm2426, %v2428, %v2424
        %v2430 = vmul.f32 1.0, %v2429
        %v2431 = vld [vmem:[%s155] sm:$0xff]
        %v2432 = vld [vmem:[%s155 + $0x8] sm:$0xff]
        %v2433 = vld [vmem:[%s155 + $0x10] sm:$0xff]
        %v2434 = vld [vmem:[%s155 + $0x18] sm:$0xff]
        %v2435 = vld [vmem:[%s155 + $0x20] sm:$0xff]
        %v2436 = vld [vmem:[%s155 + $0x28] sm:$0xff]
        %v2437 = vld [vmem:[%s155 + $0x30] sm:$0xff]
        %v2438 = vld [vmem:[%s155 + $0x38] sm:$0xff]
        %v2439 = vmul.f32 %v2431, %v2415
        %v2440 = vmul.f32 %v2432, %v2430
        %v2441 = vmul.f32 %v2433, %v2415
        %v2442 = vmul.f32 %v2434, %v2430
        %v2443 = vmul.f32 %v2435, %v2415
        %v2444 = vmul.f32 %v2436, %v2430
        %v2445 = vmul.f32 %v2437, %v2415
        %v2446 = vmul.f32 %v2438, %v2430
        %vm2447 = vcmask 130048
        %2448 = vst.msk [vmem:[%s177] sm:$0xff] %vm2447, %v2439
        %2449 = vst.msk [vmem:[%s177 + $0x8] sm:$0xff] %vm2447, %v2440
        %2450 = vst.msk [vmem:[%s177 + $0x10] sm:$0xff] %vm2447, %v2441
        %2451 = vst.msk [vmem:[%s177 + $0x18] sm:$0xff] %vm2447, %v2442
        %2452 = vst.msk [vmem:[%s177 + $0x20] sm:$0xff] %vm2447, %v2443
        %2453 = vst.msk [vmem:[%s177 + $0x28] sm:$0xff] %vm2447, %v2444
        %2454 = vst.msk [vmem:[%s177 + $0x30] sm:$0xff] %vm2447, %v2445
        %2455 = vst.msk [vmem:[%s177 + $0x38] sm:$0xff] %vm2447, %v2446
        %s2456 = sand.u32 %s75, 1
        %s2457 = scalar_lea.sflag [#allocation5], %s2456
        %s2458 = sand.u32 %s75, 1
        %s2459 = smul.addr %s2458, 64
        %s2460 = scalar_lea.vmem [#allocation8], %s2459
        // Predicated region
        $region37: #{spatial_attention.1} parent=27 // pred_check
          %p2461 = pneg %p85
        $region38: #{spatial_attention.1} parent=27 // pred_check_branch
          %2463 = sbr.rel (%p2461) target = $region40
        $region39: #{spatial_attention.1} parent=27 // pred_region
          %2465 = vsyncadd %s2457, 0
          %s2466 = smul.addr %s20, 8
          %s2467 = smul.addr %s2466, 8
          %s2468 = scalar_lea.hbm %s2, %s2467
          %s2469 = sshll.u32 %s2460, 4
          %s2470 = int_to_ptr.vmem [resolvable:$true] %s2469
          %s2471 = sshll.u32 %s2468, 4
          %s2472 = int_to_ptr.hbm [resolvable:$true] %s2471
          %2477 = dma.vmem_to_hbm [thread:$0]  %s2470, 1024, %s2472, %s2457, 128, 128, 8
        $region40: #{spatial_attention.1} parent=27 // pred_fallthru
          _
      $region28: #{spatial_attention.1} parent=5 // pred_fallthru
        _
      %p2478 = scmp.le.s32.totalorder 2, %s15
      // Predicated region
      $region41: #{spatial_attention.1} parent=5 // pred_check
        %p2479 = pneg %p2478
      $region42: #{spatial_attention.1} parent=5 // pred_check_branch
        %2481 = sbr.rel (%p2479) target = $region44
      $region43: #{spatial_attention.1} parent=5 // pred_region
        %s2482 = ssub.s32 %s15, 2
        // Predicated region
        $region45: #{spatial_attention.1} parent=43 // pred_check
          %p2483 = pneg %p91
        $region46: #{spatial_attention.1} parent=43 // pred_check_branch
          %2485 = sbr.rel (%p2483) target = $region48
        $region47: #{spatial_attention.1} parent=43 // pred_region
          %s2486 = sand.u32 %s76, 1
          %s2487 = scalar_lea.sflag [#allocation5], %s2486
          %s2488 = sand.u32 %s76, 1
          %s2489 = smul.addr %s2488, 64
          %s2490 = scalar_lea.vmem [#allocation8], %s2489
          %2492 = dma.done %s2487, 1024
        $region48: #{spatial_attention.1} parent=43 // pred_fallthru
          _
      $region44: #{spatial_attention.1} parent=5 // pred_fallthru
        _
    $region6: #{spatial_attention.1} parent=1 // loop_footer
      %s19 = sadd.s32 1, %s15
    $region7: #{spatial_attention.1} parent=1 // loop_footer_branch
      %14 = sbr.rel target = $region3
    $region8: #{spatial_attention.1} parent=1 // loop_exit
      _
    %2493 = vsyncpa [#allocation4], 1
    %s2494 = scalar_lea.sflag [#allocation4], 1
    %2495 = vsyncpa %s2494, 1
    %2496 = vsyncpa [#allocation5], 1
    %s2497 = scalar_lea.sflag [#allocation5], 1
    %2498 = vsyncpa %s2497, 1
    %2499 = vsyncpa [#allocation6], 1
    %s2500 = scalar_lea.sflag [#allocation6], 1
    %2501 = vsyncpa %s2500, 1

</llo_original>
